<compile_context>
chip_gen: v7x
topology: tpu7x:2x2x1
jax: 0.10.0
libtpu: 0.0.40
codegen_flags: <defaults>
</compile_context>

<pallas_src>
import functools

import jax
import jax.numpy as jnp
from jax.experimental import pallas as pl
from jax.experimental.pallas import tpu as pltpu

LANE = 128


def _round_up(x, m):
    return (x + m - 1) // m * m


def _pick_tiles(n_pad, target=512):
    """Pick (tile_m, tile_k) dividing n_pad; tile_k lane-aligned, tile_m gives >=2 row tiles."""
    tile_k = LANE
    for cand in (target, 256, 128):
        if cand >= LANE and n_pad % cand == 0:
            tile_k = cand
            break
    tile_m = tile_k
    # keep >=2 row tiles so dimension 0 ("parallel") can shard across 2 TCs (v7x)
    while tile_m > 8 and n_pad // tile_m < 2:
        tile_m //= 2
    return tile_m, tile_k


# --------------------------------------------------------------------------
# Fused layer:  out = adj @ (x @ W) + b   [+ relu]
#   grid = (row tiles, neighbor tiles)    -- reduction axis last
# --------------------------------------------------------------------------
def _fused_layer_kernel(adj_ref, x_ref, w_ref, b_ref, out_ref, acc_ref, *, relu):
    k = pl.program_id(1)

    @pl.when(k == 0)
    def _():
        acc_ref[...] = jnp.zeros_like(acc_ref)

    # support tile (tile_k, f_out): bf16 x bf16 MXU, f32 accumulate
    sup = jnp.dot(x_ref[...], w_ref[...],
                  preferred_element_type=jnp.float32).astype(jnp.bfloat16)
    # aggregate: acc += adj_tile @ sup_tile
    acc_ref[...] += jnp.dot(adj_ref[...], sup,
                            preferred_element_type=jnp.float32)

    @pl.when(k == pl.num_programs(1) - 1)
    def _():
        r = acc_ref[...] + b_ref[...]          # f32 bias broadcast, last k only
        if relu:
            r = jnp.maximum(r, 0.0)
        out_ref[...] = r.astype(out_ref.dtype)


def _fused_gcn_layer(adj, x, w, b, *, relu, tile_m, tile_k, out_dtype):
    n_pad = adj.shape[0]
    f_in = x.shape[1]
    f_out = w.shape[1]
    assert n_pad % tile_m == 0 and n_pad % tile_k == 0
    kernel = functools.partial(_fused_layer_kernel, relu=relu)
    return pl.pallas_call(
        kernel,
        out_shape=jax.ShapeDtypeStruct((n_pad, f_out), out_dtype),
        grid_spec=pltpu.PrefetchScalarGridSpec(
            num_scalar_prefetch=0,
            grid=(n_pad // tile_m, n_pad // tile_k),     # reduction axis last
            in_specs=[
                pl.BlockSpec((tile_m, tile_k), lambda i, k: (i, k)),   # adj tile
                pl.BlockSpec((tile_k, f_in), lambda i, k: (k, 0)),     # x rows for this k
                pl.BlockSpec((f_in, f_out), lambda i, k: (0, 0)),      # W resident
                pl.BlockSpec((1, f_out), lambda i, k: (0, 0)),         # bias resident
            ],
            out_specs=pl.BlockSpec((tile_m, f_out), lambda i, k: (i, 0)),
            scratch_shapes=[pltpu.VMEM((tile_m, f_out), jnp.float32)],
        ),
        compiler_params=pltpu.CompilerParams(
            dimension_semantics=("parallel", "arbitrary")),
    )(adj, x, w, b)


# --------------------------------------------------------------------------
# Full 2-layer GCN forward (inference mode).
# --------------------------------------------------------------------------
@functools.partial(jax.jit, static_argnames=("tile_target",))
def gcn_forward(x, adj, w1, b1, w2, b2, *, tile_target=512):
    n, f_in = x.shape
    f_hid = w1.shape[1]
    f_out = w2.shape[1]

    n_pad = _round_up(max(n, LANE), LANE)
    tile_m, tile_k = _pick_tiles(n_pad, tile_target)
    f_in_p = _round_up(f_in, LANE)
    f_hid_p = _round_up(f_hid, LANE)
    f_out_p = _round_up(f_out, LANE)

    # One-time pad + bf16 cast (adj reused across both layers); bias stays f32.
    x_p = jnp.pad(x, ((0, n_pad - n), (0, f_in_p - f_in))).astype(jnp.bfloat16)
    adj_p = jnp.pad(adj, ((0, n_pad - n), (0, n_pad - n))).astype(jnp.bfloat16)
    w1_p = jnp.pad(w1, ((0, f_in_p - f_in), (0, f_hid_p - f_hid))).astype(jnp.bfloat16)
    b1_p = jnp.pad(b1, ((0, 0), (0, f_hid_p - f_hid))).astype(jnp.float32)
    w2_p = jnp.pad(w2, ((0, f_hid_p - f_hid), (0, f_out_p - f_out))).astype(jnp.bfloat16)
    b2_p = jnp.pad(b2, ((0, 0), (0, f_out_p - f_out))).astype(jnp.float32)

    # ---- layer 1: relu(adj @ (x @ W1) + b1) ----
    h1 = _fused_gcn_layer(adj_p, x_p, w1_p, b1_p, relu=True,
                          tile_m=tile_m, tile_k=tile_k, out_dtype=jnp.bfloat16)

    # ---- dropout: inference mode (training=False) => identity ----
    # TODO(synk): training-mode dropout would use pltpu.prng_seed/prng_random_bits.

    # ---- layer 2: adj @ (h1 @ W2) + b2 ----
    out = _fused_gcn_layer(adj_p, h1, w2_p, b2_p, relu=False,
                           tile_m=tile_m, tile_k=tile_k, out_dtype=jnp.float32)

    return out[:n, :f_out]


def gcn_reference(x, adj, w1, b1, w2, b2):
    h = jnp.maximum(adj @ (x @ w1) + b1, 0.0)
    return adj @ (h @ w2) + b2


if __name__ == "__main__":
    # Small, deterministic problem: N=16 nodes, in_dim=8, out_dim=32.
    N, IN_DIM, OUT_DIM = 16, 8, 32
    key = jax.random.PRNGKey(0)
    kx, kadj, kw1, kb1, kw2, kb2 = jax.random.split(key, 6)

    x = jax.random.normal(kx, (N, IN_DIM), dtype=jnp.float32)

    # symmetric, row-normalized adjacency with self-loops
    a = jax.random.uniform(kadj, (N, N), dtype=jnp.float32)
    a = (a + a.T) * 0.5 + jnp.eye(N, dtype=jnp.float32)
    adj = a / jnp.sum(a, axis=1, keepdims=True)

    # pygcn-style uniform init: stdv = 1/sqrt(out_features)
    stdv1 = 1.0 / jnp.sqrt(jnp.float32(OUT_DIM))
    w1 = jax.random.uniform(kw1, (IN_DIM, OUT_DIM), jnp.float32, -stdv1, stdv1)
    b1 = jax.random.uniform(kb1, (1, OUT_DIM), jnp.float32, -stdv1, stdv1)
    stdv2 = 1.0 / jnp.sqrt(jnp.float32(OUT_DIM))
    w2 = jax.random.uniform(kw2, (OUT_DIM, OUT_DIM), jnp.float32, -stdv2, stdv2)
    b2 = jax.random.uniform(kb2, (1, OUT_DIM), jnp.float32, -stdv2, stdv2)

    out = gcn_forward(x, adj, w1, b1, w2, b2)
    out = jax.block_until_ready(out)

    ref = gcn_reference(x, adj, w1, b1, w2, b2)
    assert out.shape == (N, OUT_DIM)
    # bf16 operands (f32 accumulation) -> loosened tolerance.
    assert jnp.allclose(out, ref, atol=2e-2, rtol=2e-2), "mismatch vs JAX reference"

    print("KERNEL_OK")
</pallas_src>

<mosaic_0001>
module attributes {stable_mosaic.version = 11 : i64} {
  func.func @_fused_layer_kernel(%arg0: i32, %arg1: i32, %arg2: memref<64x128xbf16, #tpu.memory_space<vmem>>, %arg3: memref<128x128xbf16, #tpu.memory_space<vmem>>, %arg4: memref<128x128xbf16, #tpu.memory_space<vmem>>, %arg5: memref<1x128xf32, #tpu.memory_space<vmem>>, %arg6: memref<64x128xbf16, #tpu.memory_space<vmem>>, %arg7: memref<64x128xf32, #tpu.memory_space<vmem>>) attributes {dimension_semantics = [#tpu.dimension_semantics<parallel>, #tpu.dimension_semantics<arbitrary>], iteration_bounds = array<i64: 2, 1>, scalar_prefetch = 0 : i64, scratch_operands = 1 : i64, tpu.core_type = #tpu.core_type<tc>, window_params = [{transform_indices = @transform_0, window_bounds = array<i64: 64, 128>}, {transform_indices = @transform_1, window_bounds = array<i64: 128, 128>}, {pipeline_mode = #tpu.pipeline_mode<synchronous>, transform_indices = @transform_2, window_bounds = array<i64: 128, 128>}, {pipeline_mode = #tpu.pipeline_mode<synchronous>, transform_indices = @transform_3, window_bounds = array<i64: 1, 128>}, {transform_indices = @transform_4, window_bounds = array<i64: 64, 128>}]} {
    %c0_i32 = arith.constant 0 : i32
    %0 = arith.cmpi eq, %arg1, %c0_i32 : i32
    %1 = arith.extui %0 : i1 to i32
    %c0_i32_0 = arith.constant 0 : i32
    %2 = arith.cmpi ne, %1, %c0_i32_0 : i32
    scf.if %2 {
      %cst_13 = arith.constant 0.000000e+00 : f32
      %15 = vector.broadcast %cst_13 : f32 to vector<64x128xf32>
      %c0_14 = arith.constant 0 : index
      %c0_15 = arith.constant 0 : index
      %16 = vector.load %arg7[%c0_14, %c0_15] : memref<64x128xf32, #tpu.memory_space<vmem>>, vector<64x128xf32>
      tpu.vector_store %arg7[%c0_14, %c0_15], %15 {strides = array<i32>} : memref<64x128xf32, #tpu.memory_space<vmem>>, vector<64x128xf32>,
    } else {
    }
    %c0 = arith.constant 0 : index
    %c0_1 = arith.constant 0 : index
    %3 = vector.load %arg3[%c0, %c0_1] : memref<128x128xbf16, #tpu.memory_space<vmem>>, vector<128x128xbf16>
    %c0_2 = arith.constant 0 : index
    %c0_3 = arith.constant 0 : index
    %4 = vector.load %arg4[%c0_2, %c0_3] : memref<128x128xbf16, #tpu.memory_space<vmem>>, vector<128x128xbf16>
    %cst = arith.constant dense<0.000000e+00> : vector<128x128xf32>
    %5 = tpu.matmul %3, %4, %cst {dimension_numbers = #tpu.dot_dimension_numbers<[1], [0], [0], [1], [0, 0, 1, 1], [], []>} : vector<128x128xbf16>, vector<128x128xbf16>, vector<128x128xf32> -> vector<128x128xf32>
    %6 = arith.truncf %5 : vector<128x128xf32> to vector<128x128xbf16>
    %c0_4 = arith.constant 0 : index
    %c0_5 = arith.constant 0 : index
    %7 = vector.load %arg7[%c0_4, %c0_5] : memref<64x128xf32, #tpu.memory_space<vmem>>, vector<64x128xf32>
    %c0_6 = arith.constant 0 : index
    %c0_7 = arith.constant 0 : index
    %8 = vector.load %arg2[%c0_6, %c0_7] : memref<64x128xbf16, #tpu.memory_space<vmem>>, vector<64x128xbf16>
    %cst_8 = arith.constant dense<0.000000e+00> : vector<64x128xf32>
    %9 = tpu.matmul %8, %6, %cst_8 {dimension_numbers = #tpu.dot_dimension_numbers<[1], [0], [0], [1], [0, 0, 1, 1], [], []>} : vector<64x128xbf16>, vector<128x128xbf16>, vector<64x128xf32> -> vector<64x128xf32>
    %10 = arith.addf %7, %9 : vector<64x128xf32>
    %c0_9 = arith.constant 0 : index
    %c0_10 = arith.constant 0 : index
    %11 = vector.load %arg7[%c0_9, %c0_10] : memref<64x128xf32, #tpu.memory_space<vmem>>, vector<64x128xf32>
    tpu.vector_store %arg7[%c0_9, %c0_10], %10 {strides = array<i32>} : memref<64x128xf32, #tpu.memory_space<vmem>>, vector<64x128xf32>,
    %c0_i32_11 = arith.constant 0 : i32
    %12 = arith.cmpi eq, %arg1, %c0_i32_11 : i32
    %13 = arith.extui %12 : i1 to i32
    %c0_i32_12 = arith.constant 0 : i32
    %14 = arith.cmpi ne, %13, %c0_i32_12 : i32
    scf.if %14 {
      %c0_13 = arith.constant 0 : index
      %c0_14 = arith.constant 0 : index
      %15 = vector.load %arg7[%c0_13, %c0_14] : memref<64x128xf32, #tpu.memory_space<vmem>>, vector<64x128xf32>
      %c0_15 = arith.constant 0 : index
      %c0_16 = arith.constant 0 : index
      %16 = vector.load %arg5[%c0_15, %c0_16] : memref<1x128xf32, #tpu.memory_space<vmem>>, vector<1x128xf32>
      %17 = vector.broadcast %16 : vector<1x128xf32> to vector<64x128xf32>
      %18 = arith.addf %15, %17 : vector<64x128xf32>
      %cst_17 = arith.constant 0.000000e+00 : f32
      %19 = vector.broadcast %cst_17 : f32 to vector<64x128xf32>
      %20 = arith.maximumf %18, %19 : vector<64x128xf32>
      %21 = arith.truncf %20 : vector<64x128xf32> to vector<64x128xbf16>
      %c0_18 = arith.constant 0 : index
      %c0_19 = arith.constant 0 : index
      %22 = vector.load %arg6[%c0_18, %c0_19] : memref<64x128xbf16, #tpu.memory_space<vmem>>, vector<64x128xbf16>
      tpu.vector_store %arg6[%c0_18, %c0_19], %21 {strides = array<i32>} : memref<64x128xbf16, #tpu.memory_space<vmem>>, vector<64x128xbf16>,
    } else {
    }
    return
  }
  func.func @transform_0(%arg0: i32, %arg1: i32) -> (i32, i32) {
    %c0_i32 = arith.constant 0 : i32
    return %arg0, %arg1 : i32, i32
  }
  func.func @transform_1(%arg0: i32, %arg1: i32) -> (i32, i32) {
    %c0_i32 = arith.constant 0 : i32
    %c0_i32_0 = arith.constant 0 : i32
    return %arg1, %c0_i32 : i32, i32
  }
  func.func @transform_2(%arg0: i32, %arg1: i32) -> (i32, i32) {
    %c0_i32 = arith.constant 0 : i32
    %c0_i32_0 = arith.constant 0 : i32
    %c0_i32_1 = arith.constant 0 : i32
    return %c0_i32, %c0_i32_0 : i32, i32
  }
  func.func @transform_3(%arg0: i32, %arg1: i32) -> (i32, i32) {
    %c0_i32 = arith.constant 0 : i32
    %c0_i32_0 = arith.constant 0 : i32
    %c0_i32_1 = arith.constant 0 : i32
    return %c0_i32, %c0_i32_0 : i32, i32
  }
  func.func @transform_4(%arg0: i32, %arg1: i32) -> (i32, i32) {
    %c0_i32 = arith.constant 0 : i32
    %c0_i32_0 = arith.constant 0 : i32
    return %arg0, %c0_i32 : i32, i32
  }
}

module attributes {stable_mosaic.version = 11 : i64} {
  func.func @_fused_layer_kernel(%arg0: i32, %arg1: i32, %arg2: memref<64x128xbf16, #tpu.memory_space<vmem>>, %arg3: memref<128x128xbf16, #tpu.memory_space<vmem>>, %arg4: memref<128x128xbf16, #tpu.memory_space<vmem>>, %arg5: memref<1x128xf32, #tpu.memory_space<vmem>>, %arg6: memref<64x128xf32, #tpu.memory_space<vmem>>, %arg7: memref<64x128xf32, #tpu.memory_space<vmem>>) attributes {dimension_semantics = [#tpu.dimension_semantics<parallel>, #tpu.dimension_semantics<arbitrary>], iteration_bounds = array<i64: 2, 1>, scalar_prefetch = 0 : i64, scratch_operands = 1 : i64, tpu.core_type = #tpu.core_type<tc>, window_params = [{transform_indices = @transform_0, window_bounds = array<i64: 64, 128>}, {transform_indices = @transform_1, window_bounds = array<i64: 128, 128>}, {pipeline_mode = #tpu.pipeline_mode<synchronous>, transform_indices = @transform_2, window_bounds = array<i64: 128, 128>}, {pipeline_mode = #tpu.pipeline_mode<synchronous>, transform_indices = @transform_3, window_bounds = array<i64: 1, 128>}, {transform_indices = @transform_4, window_bounds = array<i64: 64, 128>}]} {
    %c0_i32 = arith.constant 0 : i32
    %0 = arith.cmpi eq, %arg1, %c0_i32 : i32
    %1 = arith.extui %0 : i1 to i32
    %c0_i32_0 = arith.constant 0 : i32
    %2 = arith.cmpi ne, %1, %c0_i32_0 : i32
    scf.if %2 {
      %cst_13 = arith.constant 0.000000e+00 : f32
      %15 = vector.broadcast %cst_13 : f32 to vector<64x128xf32>
      %c0_14 = arith.constant 0 : index
      %c0_15 = arith.constant 0 : index
      %16 = vector.load %arg7[%c0_14, %c0_15] : memref<64x128xf32, #tpu.memory_space<vmem>>, vector<64x128xf32>
      tpu.vector_store %arg7[%c0_14, %c0_15], %15 {strides = array<i32>} : memref<64x128xf32, #tpu.memory_space<vmem>>, vector<64x128xf32>,
    } else {
    }
    %c0 = arith.constant 0 : index
    %c0_1 = arith.constant 0 : index
    %3 = vector.load %arg3[%c0, %c0_1] : memref<128x128xbf16, #tpu.memory_space<vmem>>, vector<128x128xbf16>
    %c0_2 = arith.constant 0 : index
    %c0_3 = arith.constant 0 : index
    %4 = vector.load %arg4[%c0_2, %c0_3] : memref<128x128xbf16, #tpu.memory_space<vmem>>, vector<128x128xbf16>
    %cst = arith.constant dense<0.000000e+00> : vector<128x128xf32>
    %5 = tpu.matmul %3, %4, %cst {dimension_numbers = #tpu.dot_dimension_numbers<[1], [0], [0], [1], [0, 0, 1, 1], [], []>} : vector<128x128xbf16>, vector<128x128xbf16>, vector<128x128xf32> -> vector<128x128xf32>
    %6 = arith.truncf %5 : vector<128x128xf32> to vector<128x128xbf16>
    %c0_4 = arith.constant 0 : index
    %c0_5 = arith.constant 0 : index
    %7 = vector.load %arg7[%c0_4, %c0_5] : memref<64x128xf32, #tpu.memory_space<vmem>>, vector<64x128xf32>
    %c0_6 = arith.constant 0 : index
    %c0_7 = arith.constant 0 : index
    %8 = vector.load %arg2[%c0_6, %c0_7] : memref<64x128xbf16, #tpu.memory_space<vmem>>, vector<64x128xbf16>
    %cst_8 = arith.constant dense<0.000000e+00> : vector<64x128xf32>
    %9 = tpu.matmul %8, %6, %cst_8 {dimension_numbers = #tpu.dot_dimension_numbers<[1], [0], [0], [1], [0, 0, 1, 1], [], []>} : vector<64x128xbf16>, vector<128x128xbf16>, vector<64x128xf32> -> vector<64x128xf32>
    %10 = arith.addf %7, %9 : vector<64x128xf32>
    %c0_9 = arith.constant 0 : index
    %c0_10 = arith.constant 0 : index
    %11 = vector.load %arg7[%c0_9, %c0_10] : memref<64x128xf32, #tpu.memory_space<vmem>>, vector<64x128xf32>
    tpu.vector_store %arg7[%c0_9, %c0_10], %10 {strides = array<i32>} : memref<64x128xf32, #tpu.memory_space<vmem>>, vector<64x128xf32>,
    %c0_i32_11 = arith.constant 0 : i32
    %12 = arith.cmpi eq, %arg1, %c0_i32_11 : i32
    %13 = arith.extui %12 : i1 to i32
    %c0_i32_12 = arith.constant 0 : i32
    %14 = arith.cmpi ne, %13, %c0_i32_12 : i32
    scf.if %14 {
      %c0_13 = arith.constant 0 : index
      %c0_14 = arith.constant 0 : index
      %15 = vector.load %arg7[%c0_13, %c0_14] : memref<64x128xf32, #tpu.memory_space<vmem>>, vector<64x128xf32>
      %c0_15 = arith.constant 0 : index
      %c0_16 = arith.constant 0 : index
      %16 = vector.load %arg5[%c0_15, %c0_16] : memref<1x128xf32, #tpu.memory_space<vmem>>, vector<1x128xf32>
      %17 = vector.broadcast %16 : vector<1x128xf32> to vector<64x128xf32>
      %18 = arith.addf %15, %17 : vector<64x128xf32>
      %c0_17 = arith.constant 0 : index
      %c0_18 = arith.constant 0 : index
      %19 = vector.load %arg6[%c0_17, %c0_18] : memref<64x128xf32, #tpu.memory_space<vmem>>, vector<64x128xf32>
      tpu.vector_store %arg6[%c0_17, %c0_18], %18 {strides = array<i32>} : memref<64x128xf32, #tpu.memory_space<vmem>>, vector<64x128xf32>,
    } else {
    }
    return
  }
  func.func @transform_0(%arg0: i32, %arg1: i32) -> (i32, i32) {
    %c0_i32 = arith.constant 0 : i32
    return %arg0, %arg1 : i32, i32
  }
  func.func @transform_1(%arg0: i32, %arg1: i32) -> (i32, i32) {
    %c0_i32 = arith.constant 0 : i32
    %c0_i32_0 = arith.constant 0 : i32
    return %arg1, %c0_i32 : i32, i32
  }
  func.func @transform_2(%arg0: i32, %arg1: i32) -> (i32, i32) {
    %c0_i32 = arith.constant 0 : i32
    %c0_i32_0 = arith.constant 0 : i32
    %c0_i32_1 = arith.constant 0 : i32
    return %c0_i32, %c0_i32_0 : i32, i32
  }
  func.func @transform_3(%arg0: i32, %arg1: i32) -> (i32, i32) {
    %c0_i32 = arith.constant 0 : i32
    %c0_i32_0 = arith.constant 0 : i32
    %c0_i32_1 = arith.constant 0 : i32
    return %c0_i32, %c0_i32_0 : i32, i32
  }
  func.func @transform_4(%arg0: i32, %arg1: i32) -> (i32, i32) {
    %c0_i32 = arith.constant 0 : i32
    %c0_i32_0 = arith.constant 0 : i32
    return %arg0, %c0_i32 : i32, i32
  }
}

</mosaic_0001>

<llo_original>
// kernel: gcn_forward.2
$region0: #{gcn_forward.2}
  #allocation0 [shape = 'u32[]', space=smem, size = 0x4, offset = 0x4, fixed_abs, tag = 'smem constant byte address 0x4 - core index']
  #allocation1 [shape = 'u32[144,128]{1,0:T(1,128)}', space=vmem, size = 0x12000, scoped, tag = 'internal scratch']
  #allocation2 [shape = 'f32[64,128]{1,0:T(8,128)}', space=vmem, size = 0x8000, scoped, tag = 'scratch operand']
  %s0 = inlined_call_operand.vmem [shape: bf16[128,128], index: 0, kind: input, shape index: {}]
  %s1 = inlined_call_operand.vmem [shape: bf16[128,128], index: 1, kind: input, shape index: {}]
  %s2 = inlined_call_operand.vmem [shape: bf16[128,128], index: 2, kind: input, shape index: {}]
  %s3 = inlined_call_operand.vmem [shape: f32[1,128], index: 3, kind: input, shape index: {}]
  %s4 = inlined_call_operand.vmem [shape: bf16[128,128], index: 4, kind: output, shape index: {}]
  %s5 = sld [smem:[#allocation0]]
  $region57: #{gcn_forward.2} parent=0
    _
  %s7 = ssub.s32 1, %s5
  %s8 = scalar_select 0, %s7, %s5
  loop: start=0, step=1, limit=4
  $region2: #{gcn_forward.2} parent=0 // loop_pre_header
    _
  $region3: #{gcn_forward.2} parent=0 // loop_header
    %s10 = sphi 0, %s14
    %p11 = scmp.ge.s32.totalorder %s10, 4
    %s17 = sphi 0, %s29
    %s18 = sphi 0, %s25
    %s19 = sphi 0, %s17
    %s20 = sphi 0, %s18
    %s21 = sphi 0, %s19
    %s22 = sphi 0, %s20
    %s34 = sphi 0, %s36
    %s37 = sphi 0, %s34
    %s38 = sphi 0, %s37
    %s54 = sphi 0, %s38
    %s60 = sphi 0, %s62
    %s63 = sphi 0, %s60
    %s64 = sphi 0, %s63
    %s80 = sphi 0, %s64
    %s84 = sphi 0, %s84
    %s86 = sphi 0, %s84
    %s87 = sphi 0, %s86
    %s101 = sphi 0, %s87
    %s105 = sphi 0, %s105
    %s107 = sphi 0, %s105
    %s108 = sphi 0, %s107
    %s122 = sphi 0, %s108
    %s128 = sphi 0, %s130
    %s131 = sphi 0, %s128
    %s132 = sphi 0, %s131
    %s148 = sphi 0, %s132
  $region4: #{gcn_forward.2} parent=0 // loop_header_branch
    %13 = sbr.rel (%p11) target = $region8
  $region5: #{gcn_forward.2} parent=0 // loop_body
    %s15 = ssub.s32 %s10, 1
    %s16 = ssub.s32 %s10, 2
    %s23 = sadd.s32 1, %s18
    %p24 = scmp.ge.s32.totalorder %s23, 1
    %s25 = scalar_select %p24, 0, %s23
    %s26 = sadd.s32 1, %s17
    %s27 = scalar_select %p24, %s26, %s17
    %p28 = scmp.ge.s32.totalorder %s27, 2
    %s29 = scalar_select %p28, 0, %s27
    %s30 = ssub.s32 %s17, %s29
    %s31 = ssub.s32 %s18, %s25
    %s32 = sor.u32 %s30, %s31
    %p33 = scmp.eq.s32.totalorder %s32, 0
    %s35 = sadd.s32 %s34, 1
    %s36 = scalar_select %p33, %s34, %s35
    %p39 = pneg %p33
    %p40 = scmp.eq.s32.totalorder %s10, 1
    %p41 = por %p39, %p40
    %p42 = scmp.ne.s32.totalorder %s34, %s37
    %p43 = scmp.eq.s32.totalorder %s10, 0
    %p44 = por %p42, %p43
    %p45 = scmp.ne.s32.totalorder %s34, %s37
    %p46 = scmp.eq.s32.totalorder %s15, 1
    %p47 = por %p45, %p46
    %p48 = scmp.ne.s32.totalorder %s37, %s38
    %p49 = scmp.eq.s32.totalorder %s15, 0
    %p50 = por %p48, %p49
    %p51 = scmp.ne.s32.totalorder %s37, %s38
    %p52 = scmp.eq.s32.totalorder %s16, 1
    %p53 = por %p51, %p52
    %p55 = scmp.ne.s32.totalorder %s38, %s54
    %p56 = scmp.eq.s32.totalorder %s16, 0
    %p57 = por %p55, %p56
    %s58 = ssub.s32 %s18, %s25
    %p59 = scmp.eq.s32.totalorder %s58, 0
    %s61 = sadd.s32 %s60, 1
    %s62 = scalar_select %p59, %s60, %s61
    %p65 = pneg %p59
    %p66 = scmp.eq.s32.totalorder %s10, 1
    %p67 = por %p65, %p66
    %p68 = scmp.ne.s32.totalorder %s60, %s63
    %p69 = scmp.eq.s32.totalorder %s10, 0
    %p70 = por %p68, %p69
    %p71 = scmp.ne.s32.totalorder %s60, %s63
    %p72 = scmp.eq.s32.totalorder %s15, 1
    %p73 = por %p71, %p72
    %p74 = scmp.ne.s32.totalorder %s63, %s64
    %p75 = scmp.eq.s32.totalorder %s15, 0
    %p76 = por %p74, %p75
    %p77 = scmp.ne.s32.totalorder %s63, %s64
    %p78 = scmp.eq.s32.totalorder %s16, 1
    %p79 = por %p77, %p78
    %p81 = scmp.ne.s32.totalorder %s64, %s80
    %p82 = scmp.eq.s32.totalorder %s16, 0
    %p83 = por %p81, %p82
    %s85 = sadd.s32 %s84, 1
    %p88 = scmp.eq.s32.totalorder %s10, 1
    %p89 = scmp.ne.s32.totalorder %s84, %s86
    %p90 = scmp.eq.s32.totalorder %s10, 0
    %p91 = por %p89, %p90
    %p92 = scmp.ne.s32.totalorder %s84, %s86
    %p93 = scmp.eq.s32.totalorder %s15, 1
    %p94 = por %p92, %p93
    %p95 = scmp.ne.s32.totalorder %s86, %s87
    %p96 = scmp.eq.s32.totalorder %s15, 0
    %p97 = por %p95, %p96
    %p98 = scmp.ne.s32.totalorder %s86, %s87
    %p99 = scmp.eq.s32.totalorder %s16, 1
    %p100 = por %p98, %p99
    %p102 = scmp.ne.s32.totalorder %s87, %s101
    %p103 = scmp.eq.s32.totalorder %s16, 0
    %p104 = por %p102, %p103
    %s106 = sadd.s32 %s105, 1
    %p109 = scmp.eq.s32.totalorder %s10, 1
    %p110 = scmp.ne.s32.totalorder %s105, %s107
    %p111 = scmp.eq.s32.totalorder %s10, 0
    %p112 = por %p110, %p111
    %p113 = scmp.ne.s32.totalorder %s105, %s107
    %p114 = scmp.eq.s32.totalorder %s15, 1
    %p115 = por %p113, %p114
    %p116 = scmp.ne.s32.totalorder %s107, %s108
    %p117 = scmp.eq.s32.totalorder %s15, 0
    %p118 = por %p116, %p117
    %p119 = scmp.ne.s32.totalorder %s107, %s108
    %p120 = scmp.eq.s32.totalorder %s16, 1
    %p121 = por %p119, %p120
    %p123 = scmp.ne.s32.totalorder %s108, %s122
    %p124 = scmp.eq.s32.totalorder %s16, 0
    %p125 = por %p123, %p124
    %s126 = ssub.s32 %s17, %s29
    %p127 = scmp.eq.s32.totalorder %s126, 0
    %s129 = sadd.s32 %s128, 1
    %s130 = scalar_select %p127, %s128, %s129
    %p133 = pneg %p127
    %p134 = scmp.eq.s32.totalorder %s10, 1
    %p135 = por %p133, %p134
    %p136 = scmp.ne.s32.totalorder %s128, %s131
    %p137 = scmp.eq.s32.totalorder %s10, 0
    %p138 = por %p136, %p137
    %p139 = scmp.ne.s32.totalorder %s128, %s131
    %p140 = scmp.eq.s32.totalorder %s15, 1
    %p141 = por %p139, %p140
    %p142 = scmp.ne.s32.totalorder %s131, %s132
    %p143 = scmp.eq.s32.totalorder %s15, 0
    %p144 = por %p142, %p143
    %p145 = scmp.ne.s32.totalorder %s131, %s132
    %p146 = scmp.eq.s32.totalorder %s16, 1
    %p147 = por %p145, %p146
    %p149 = scmp.ne.s32.totalorder %s132, %s148
    %p150 = scmp.eq.s32.totalorder %s16, 0
    %p151 = por %p149, %p150
    %p152 = scmp.le.s32.totalorder 1, %s10
    %p153 = scmp.lt.s32.totalorder %s10, 3
    %p154 = pnand %p152, %p153
    %p155 = pneg %p154
    // Predicated region
    $region9: #{gcn_forward.2} parent=5 // pred_check
      _
    $region10: #{gcn_forward.2} parent=5 // pred_check_branch
      %157 = sbr.rel (%p154) target = $region12
    $region11: #{gcn_forward.2} parent=5 // pred_region
      %s158 = ssub.s32 %s10, 1
      // Predicated region
      $region13: #{gcn_forward.2} parent=11 // pred_check
        %p159 = pneg %p76
      $region14: #{gcn_forward.2} parent=11 // pred_check_branch
        %161 = sbr.rel (%p159) target = $region16
      $region15: #{gcn_forward.2} parent=11 // pred_region
        %s162 = smul.u32 16, %s20
        %p163 = scmp.lt.s32.totalorder %s162, 15
        %s164 = scalar_select %p163, %s162, 15
        %s165 = smul.addr %s164, 4
        %s166 = scalar_lea.vmem %s1, %s165
        %s167 = smul.u32 16, %s20
      $region16: #{gcn_forward.2} parent=11 // pred_fallthru
        _
      // Predicated region
      $region17: #{gcn_forward.2} parent=11 // pred_check
        %p168 = pneg %p97
      $region18: #{gcn_forward.2} parent=11 // pred_check_branch
        %170 = sbr.rel (%p168) target = $region20
      $region19: #{gcn_forward.2} parent=11 // pred_region
        _
      $region20: #{gcn_forward.2} parent=11 // pred_fallthru
        _
      // Predicated region
      $region21: #{gcn_forward.2} parent=11 // pred_check
        %p171 = pneg %p118
      $region22: #{gcn_forward.2} parent=11 // pred_check_branch
        %173 = sbr.rel (%p171) target = $region24
      $region23: #{gcn_forward.2} parent=11 // pred_region
        _
      $region24: #{gcn_forward.2} parent=11 // pred_fallthru
        _
    $region12: #{gcn_forward.2} parent=5 // pred_fallthru
      _
    %p174 = scmp.lt.s32.totalorder %s10, 2
    // Predicated region
    $region25: #{gcn_forward.2} parent=5 // pred_check
      %p175 = pneg %p174
    $region26: #{gcn_forward.2} parent=5 // pred_check_branch
      %177 = sbr.rel (%p175) target = $region28
    $region27: #{gcn_forward.2} parent=5 // pred_region
      // Predicated region
      $region29: #{gcn_forward.2} parent=27 // pred_check
        %p178 = pneg %p44
      $region30: #{gcn_forward.2} parent=27 // pred_check_branch
        %180 = sbr.rel (%p178) target = $region32
      $region31: #{gcn_forward.2} parent=27 // pred_region
        %s181 = smul.u32 8, %s17
        %p182 = scmp.lt.s32.totalorder %s181, 15
        %s183 = scalar_select %p182, %s181, 15
        %p184 = scmp.lt.s32.totalorder %s18, 0
        %s185 = scalar_select %p184, %s18, 0
        %s186 = sadd.s32 %s185, %s183
        %s187 = smul.addr %s186, 4
        %s188 = scalar_lea.vmem %s0, %s187
        %s189 = smul.u32 8, %s17
      $region32: #{gcn_forward.2} parent=27 // pred_fallthru
        _
    $region28: #{gcn_forward.2} parent=5 // pred_fallthru
      _
    %p190 = scmp.le.s32.totalorder 1, %s10
    %p191 = scmp.lt.s32.totalorder %s10, 3
    %p192 = pnand %p190, %p191
    %p193 = pneg %p192
    // Predicated region
    $region33: #{gcn_forward.2} parent=5 // pred_check
      _
    $region34: #{gcn_forward.2} parent=5 // pred_check_branch
      %195 = sbr.rel (%p192) target = $region36
    $region35: #{gcn_forward.2} parent=5 // pred_region
      %s196 = ssub.s32 %s10, 1
      %s197 = smul.u32 8, %s19
      %p198 = scmp.lt.s32.totalorder %s197, 15
      %s199 = scalar_select %p198, %s197, 15
      %p200 = scmp.lt.s32.totalorder %s20, 0
      %s201 = scalar_select %p200, %s20, 0
      %s202 = sadd.s32 %s201, %s199
      %s203 = smul.addr %s202, 4
      %s204 = scalar_lea.vmem %s0, %s203
      %p205 = pneg %p50
      %p206 = pneg %p47
      %s207 = smul.u32 16, %s20
      %p208 = scmp.lt.s32.totalorder %s207, 15
      %s209 = scalar_select %p208, %s207, 15
      %s210 = smul.addr %s209, 4
      %s211 = scalar_lea.vmem %s1, %s210
      %p212 = pneg %p76
      %p213 = pneg %p73
      %p214 = pneg %p97
      %p215 = pneg %p94
      %p216 = pneg %p118
      %p217 = pneg %p115
      %p218 = pneg %p144
      %p219 = pneg %p141
      %s220 = smul.u32 8, %s19
      %p221 = scmp.lt.s32.totalorder %s220, 15
      %s222 = scalar_select %p221, %s220, 15
      %s223 = smul.addr %s222, 4
      %s224 = scalar_lea.vmem %s4, %s223
      %s225 = smul.u32 8, %s19
      %p226 = scmp.lt.s32.totalorder %s225, 15
      %s227 = scalar_select %p226, %s225, 15
      %p228 = scmp.lt.s32.totalorder %s20, 0
      %s229 = scalar_select %p228, %s20, 0
      %s230 = sadd.s32 %s229, %s227
      %s231 = smul.addr %s230, 4
      %s232 = scalar_lea.vmem %s0, %s231
      %s233 = smul.u32 8, %s19
      %s234 = smul.u32 16, %s20
      %p235 = scmp.lt.s32.totalorder %s234, 15
      %s236 = scalar_select %p235, %s234, 15
      %s237 = smul.addr %s236, 4
      %s238 = scalar_lea.vmem %s1, %s237
      %s239 = smul.u32 16, %s20
      %s240 = smul.u32 8, %s19
      %p241 = scmp.lt.s32.totalorder %s240, 15
      %s242 = scalar_select %p241, %s240, 15
      %s243 = smul.addr %s242, 4
      %s244 = scalar_lea.vmem %s4, %s243
      %s245 = smul.u32 8, %s19
      %p247 = scmp.eq.s32.totalorder %s20, 0
      // Predicated region
      $region37: #{gcn_forward.2} parent=35 // pred_check
        %p248 = pneg %p247
      $region38: #{gcn_forward.2} parent=35 // pred_check_branch
        %250 = sbr.rel (%p248) target = $region40
      $region39: #{gcn_forward.2} parent=35 // pred_region
        %251 = vst [vmem:[#allocation2] sm:$0xff] 0.0
        %252 = vst [vmem:[#allocation2 + $0x8] sm:$0xff] 0.0
        %253 = vst [vmem:[#allocation2 + $0x10] sm:$0xff] 0.0
        %254 = vst [vmem:[#allocation2 + $0x18] sm:$0xff] 0.0
        %255 = vst [vmem:[#allocation2 + $0x20] sm:$0xff] 0.0
        %256 = vst [vmem:[#allocation2 + $0x28] sm:$0xff] 0.0
        %257 = vst [vmem:[#allocation2 + $0x30] sm:$0xff] 0.0
        %258 = vst [vmem:[#allocation2 + $0x38] sm:$0xff] 0.0
      $region40: #{gcn_forward.2} parent=35 // pred_fallthru
        _
      %v259 = vld [vmem:[%s238] sm:$0xf]
      %v260 = vld [vmem:[%s238 + $0x4] sm:$0xf]
      %v261 = vld [vmem:[%s238 + $0x8] sm:$0xf]
      %v262 = vld [vmem:[%s238 + $0xc] sm:$0xf]
      %v263 = vld [vmem:[%s238 + $0x10] sm:$0xf]
      %v264 = vld [vmem:[%s238 + $0x14] sm:$0xf]
      %v265 = vld [vmem:[%s238 + $0x18] sm:$0xf]
      %v266 = vld [vmem:[%s238 + $0x1c] sm:$0xf]
      %v267 = vld [vmem:[%s238 + $0x20] sm:$0xf]
      %v268 = vld [vmem:[%s238 + $0x24] sm:$0xf]
      %v269 = vld [vmem:[%s238 + $0x28] sm:$0xf]
      %v270 = vld [vmem:[%s238 + $0x2c] sm:$0xf]
      %v271 = vld [vmem:[%s238 + $0x30] sm:$0xf]
      %v272 = vld [vmem:[%s238 + $0x34] sm:$0xf]
      %v273 = vld [vmem:[%s238 + $0x38] sm:$0xf]
      %v274 = vld [vmem:[%s238 + $0x3c] sm:$0xf]
      %v275 = vld [vmem:[%s2] sm:$0xf]
      %v276 = vld [vmem:[%s2 + $0x4] sm:$0xf]
      %v277 = vld [vmem:[%s2 + $0x8] sm:$0xf]
      %v278 = vld [vmem:[%s2 + $0xc] sm:$0xf]
      %v279 = vld [vmem:[%s2 + $0x10] sm:$0xf]
      %v280 = vld [vmem:[%s2 + $0x14] sm:$0xf]
      %v281 = vld [vmem:[%s2 + $0x18] sm:$0xf]
      %v282 = vld [vmem:[%s2 + $0x1c] sm:$0xf]
      %v283 = vld [vmem:[%s2 + $0x20] sm:$0xf]
      %v284 = vld [vmem:[%s2 + $0x24] sm:$0xf]
      %v285 = vld [vmem:[%s2 + $0x28] sm:$0xf]
      %v286 = vld [vmem:[%s2 + $0x2c] sm:$0xf]
      %v287 = vld [vmem:[%s2 + $0x30] sm:$0xf]
      %v288 = vld [vmem:[%s2 + $0x34] sm:$0xf]
      %v289 = vld [vmem:[%s2 + $0x38] sm:$0xf]
      %v290 = vld [vmem:[%s2 + $0x3c] sm:$0xf]
      %v307 = vunpack.c.l.b16 %v259
      %v308 = vunpack.c.l.b16 %v260
      %v309 = vunpack.c.l.b16 %v261
      %v310 = vunpack.c.l.b16 %v262
      %v311 = vunpack.c.l.b16 %v263
      %v312 = vunpack.c.l.b16 %v264
      %v313 = vunpack.c.l.b16 %v265
      %v314 = vunpack.c.l.b16 %v266
      %v315 = vunpack.c.l.b16 %v267
      %v316 = vunpack.c.l.b16 %v268
      %v317 = vunpack.c.l.b16 %v269
      %v318 = vunpack.c.l.b16 %v270
      %v319 = vunpack.c.l.b16 %v271
      %v320 = vunpack.c.l.b16 %v272
      %v321 = vunpack.c.l.b16 %v273
      %v322 = vunpack.c.l.b16 %v274
      %v323 = vpack.c.b16 %v308, %v307
      %v324 = vpack.c.b16 %v310, %v309
      %v325 = vpack.c.b16 %v312, %v311
      %v326 = vpack.c.b16 %v314, %v313
      %v327 = vpack.c.b16 %v316, %v315
      %v328 = vpack.c.b16 %v318, %v317
      %v329 = vpack.c.b16 %v320, %v319
      %v330 = vpack.c.b16 %v322, %v321
      %v355 = vunpack.c.l.b16 %v275
      %v356 = vunpack.c.l.b16 %v276
      %v357 = vunpack.c.l.b16 %v277
      %v358 = vunpack.c.l.b16 %v278
      %v359 = vunpack.c.l.b16 %v279
      %v360 = vunpack.c.l.b16 %v280
      %v361 = vunpack.c.l.b16 %v281
      %v362 = vunpack.c.l.b16 %v282
      %v363 = vunpack.c.l.b16 %v283
      %v364 = vunpack.c.l.b16 %v284
      %v365 = vunpack.c.l.b16 %v285
      %v366 = vunpack.c.l.b16 %v286
      %v367 = vunpack.c.l.b16 %v287
      %v368 = vunpack.c.l.b16 %v288
      %v369 = vunpack.c.l.b16 %v289
      %v370 = vunpack.c.l.b16 %v290
      %v371 = vpack.c.b16 %v356, %v355
      %v372 = vpack.c.b16 %v358, %v357
      %v373 = vpack.c.b16 %v360, %v359
      %v374 = vpack.c.b16 %v362, %v361
      %v375 = vpack.c.b16 %v364, %v363
      %v376 = vpack.c.b16 %v366, %v365
      %v377 = vpack.c.b16 %v368, %v367
      %v378 = vpack.c.b16 %v370, %v369
      %387 = vmatprep.subr.bf16.mxu0 0
      %388 = vmatpush1.bf16.msra.mxu0 %v371
      %389 = vmatprep.subr.bf16.mxu0 0
      %390 = vmatpush1.bf16.msra.mxu0 %v372
      %391 = vmatprep.subr.bf16.mxu0 0
      %392 = vmatpush1.bf16.msra.mxu0 %v373
      %393 = vmatprep.subr.bf16.mxu0 0
      %394 = vmatpush1.bf16.msra.mxu0 %v374
      %395 = vmatprep.subr.bf16.mxu0 0
      %396 = vmatpush1.bf16.msra.mxu0 %v375
      %397 = vmatprep.subr.bf16.mxu0 0
      %398 = vmatpush1.bf16.msra.mxu0 %v376
      %399 = vmatprep.subr.bf16.mxu0 0
      %400 = vmatpush1.bf16.msra.mxu0 %v377
      %401 = vmatprep.subr.bf16.mxu0 0
      %402 = vmatpush1.bf16.msra.mxu0 %v378
      %403 = vmatprep.subr.bf16.mxu0 0
      %404 = vmatpush1.bf16.msra.mxu0 0
      %405 = vmatprep.subr.bf16.mxu0 0
      %406 = vmatpush1.bf16.msra.mxu0 0
      %407 = vmatprep.subr.bf16.mxu0 0
      %408 = vmatpush1.bf16.msra.mxu0 0
      %409 = vmatprep.subr.bf16.mxu0 0
      %410 = vmatpush1.bf16.msra.mxu0 0
      %411 = vmatprep.subr.bf16.mxu0 0
      %412 = vmatpush1.bf16.msra.mxu0 0
      %413 = vmatprep.subr.bf16.mxu0 0
      %414 = vmatpush1.bf16.msra.mxu0 0
      %415 = vmatprep.subr.bf16.mxu0 0
      %416 = vmatpush1.bf16.msra.mxu0 0
      %417 = vmatprep.subr.bf16.mxu0 0
      %418 = vmatpush1.bf16.msra.mxu0 0
      %419 = vmatprep.mubr.bf16.mxu0 0
      %420 = vmatmul.mubr.bf16.gmra.mrb[0].mxu0 %v323
      %v421 = vpop.f32.mrb[0].mxu0
      %v422 = vadd.f32 0.0, %v421
      %v423 = vpop.f32.mrb[0].mxu0
      %v424 = vpop.f32.mrb[0].mxu0
      %v425 = vadd.f32 0.0, %v424
      %v426 = vpop.f32.mrb[0].mxu0
      %427 = vmatprep.mubr.bf16.mxu0 0
      %428 = vmatmul.mubr.bf16.gmra.mrb[0].mxu0 %v324
      %v429 = vpop.f32.mrb[0].mxu0
      %v430 = vadd.f32 0.0, %v429
      %v431 = vpop.f32.mrb[0].mxu0
      %v432 = vpop.f32.mrb[0].mxu0
      %v433 = vadd.f32 0.0, %v432
      %v434 = vpop.f32.mrb[0].mxu0
      %435 = vmatprep.mubr.bf16.mxu0 0
      %436 = vmatmul.mubr.bf16.gmra.mrb[0].mxu0 %v325
      %v437 = vpop.f32.mrb[0].mxu0
      %v438 = vadd.f32 0.0, %v437
      %v439 = vpop.f32.mrb[0].mxu0
      %v440 = vpop.f32.mrb[0].mxu0
      %v441 = vadd.f32 0.0, %v440
      %v442 = vpop.f32.mrb[0].mxu0
      %443 = vmatprep.mubr.bf16.mxu0 0
      %444 = vmatmul.mubr.bf16.gmra.mrb[0].mxu0 %v326
      %v445 = vpop.f32.mrb[0].mxu0
      %v446 = vadd.f32 0.0, %v445
      %v447 = vpop.f32.mrb[0].mxu0
      %v448 = vpop.f32.mrb[0].mxu0
      %v449 = vadd.f32 0.0, %v448
      %v450 = vpop.f32.mrb[0].mxu0
      %451 = vmatprep.mubr.bf16.mxu0 0
      %452 = vmatmul.mubr.bf16.gmra.mrb[0].mxu0 %v327
      %v453 = vpop.f32.mrb[0].mxu0
      %v454 = vadd.f32 0.0, %v453
      %v455 = vpop.f32.mrb[0].mxu0
      %v456 = vpop.f32.mrb[0].mxu0
      %v457 = vadd.f32 0.0, %v456
      %v458 = vpop.f32.mrb[0].mxu0
      %459 = vmatprep.mubr.bf16.mxu0 0
      %460 = vmatmul.mubr.bf16.gmra.mrb[0].mxu0 %v328
      %v461 = vpop.f32.mrb[0].mxu0
      %v462 = vadd.f32 0.0, %v461
      %v463 = vpop.f32.mrb[0].mxu0
      %v464 = vpop.f32.mrb[0].mxu0
      %v465 = vadd.f32 0.0, %v464
      %v466 = vpop.f32.mrb[0].mxu0
      %467 = vmatprep.mubr.bf16.mxu0 0
      %468 = vmatmul.mubr.bf16.gmra.mrb[0].mxu0 %v329
      %v469 = vpop.f32.mrb[0].mxu0
      %v470 = vadd.f32 0.0, %v469
      %v471 = vpop.f32.mrb[0].mxu0
      %v472 = vpop.f32.mrb[0].mxu0
      %v473 = vadd.f32 0.0, %v472
      %v474 = vpop.f32.mrb[0].mxu0
      %475 = vmatprep.mubr.bf16.mxu0 0
      %476 = vmatmul.mubr.bf16.gmra.mrb[0].mxu0 %v330
      %v477 = vpop.f32.mrb[0].mxu0
      %v478 = vadd.f32 0.0, %v477
      %v479 = vpop.f32.mrb[0].mxu0
      %v480 = vpop.f32.mrb[0].mxu0
      %v481 = vadd.f32 0.0, %v480
      %v482 = vpop.f32.mrb[0].mxu0
      %483 = vdwg.mxu0
      %v484 = vpack.c.bf16 %v425, %v422
      %v485 = vpack.c.bf16 %v433, %v430
      %v486 = vpack.c.bf16 %v441, %v438
      %v487 = vpack.c.bf16 %v449, %v446
      %v488 = vpack.c.bf16 %v457, %v454
      %v489 = vpack.c.bf16 %v465, %v462
      %v490 = vpack.c.bf16 %v473, %v470
      %v491 = vpack.c.bf16 %v481, %v478
      %v492 = vld [vmem:[#allocation2] sm:$0xff]
      %v493 = vld [vmem:[#allocation2 + $0x8] sm:$0xff]
      %v494 = vld [vmem:[#allocation2 + $0x10] sm:$0xff]
      %v495 = vld [vmem:[#allocation2 + $0x18] sm:$0xff]
      %v496 = vld [vmem:[#allocation2 + $0x20] sm:$0xff]
      %v497 = vld [vmem:[#allocation2 + $0x28] sm:$0xff]
      %v498 = vld [vmem:[#allocation2 + $0x30] sm:$0xff]
      %v499 = vld [vmem:[#allocation2 + $0x38] sm:$0xff]
      %v500 = vld [vmem:[%s232] sm:$0xf]
      %v501 = vld [vmem:[%s232 + $0x4] sm:$0xf]
      %v502 = vld [vmem:[%s232 + $0x8] sm:$0xf]
      %v503 = vld [vmem:[%s232 + $0xc] sm:$0xf]
      %v504 = vld [vmem:[%s232 + $0x10] sm:$0xf]
      %v505 = vld [vmem:[%s232 + $0x14] sm:$0xf]
      %v506 = vld [vmem:[%s232 + $0x18] sm:$0xf]
      %v507 = vld [vmem:[%s232 + $0x1c] sm:$0xf]
      %v516 = vunpack.c.l.b16 %v500
      %v517 = vunpack.c.l.b16 %v501
      %v518 = vunpack.c.l.b16 %v502
      %v519 = vunpack.c.l.b16 %v503
      %v520 = vunpack.c.l.b16 %v504
      %v521 = vunpack.c.l.b16 %v505
      %v522 = vunpack.c.l.b16 %v506
      %v523 = vunpack.c.l.b16 %v507
      %v524 = vpack.c.b16 %v517, %v516
      %v525 = vpack.c.b16 %v519, %v518
      %v526 = vpack.c.b16 %v521, %v520
      %v527 = vpack.c.b16 %v523, %v522
      %532 = vmatprep.subr.bf16.mxu0 0
      %533 = vmatpush1.bf16.msra.mxu0 %v484
      %534 = vmatprep.subr.bf16.mxu0 0
      %535 = vmatpush1.bf16.msra.mxu0 %v485
      %536 = vmatprep.subr.bf16.mxu0 0
      %537 = vmatpush1.bf16.msra.mxu0 %v486
      %538 = vmatprep.subr.bf16.mxu0 0
      %539 = vmatpush1.bf16.msra.mxu0 %v487
      %540 = vmatprep.subr.bf16.mxu0 0
      %541 = vmatpush1.bf16.msra.mxu0 %v488
      %542 = vmatprep.subr.bf16.mxu0 0
      %543 = vmatpush1.bf16.msra.mxu0 %v489
      %544 = vmatprep.subr.bf16.mxu0 0
      %545 = vmatpush1.bf16.msra.mxu0 %v490
      %546 = vmatprep.subr.bf16.mxu0 0
      %547 = vmatpush1.bf16.msra.mxu0 %v491
      %548 = vmatprep.subr.bf16.mxu0 0
      %549 = vmatpush1.bf16.msra.mxu0 0
      %550 = vmatprep.subr.bf16.mxu0 0
      %551 = vmatpush1.bf16.msra.mxu0 0
      %552 = vmatprep.subr.bf16.mxu0 0
      %553 = vmatpush1.bf16.msra.mxu0 0
      %554 = vmatprep.subr.bf16.mxu0 0
      %555 = vmatpush1.bf16.msra.mxu0 0
      %556 = vmatprep.subr.bf16.mxu0 0
      %557 = vmatpush1.bf16.msra.mxu0 0
      %558 = vmatprep.subr.bf16.mxu0 0
      %559 = vmatpush1.bf16.msra.mxu0 0
      %560 = vmatprep.subr.bf16.mxu0 0
      %561 = vmatpush1.bf16.msra.mxu0 0
      %562 = vmatprep.subr.bf16.mxu0 0
      %563 = vmatpush1.bf16.msra.mxu0 0
      %564 = vmatprep.mubr.bf16.mxu0 0
      %565 = vmatmul.mubr.bf16.gmra.mrb[0].mxu0 %v524
      %v566 = vpop.f32.mrb[0].mxu0
      %v567 = vadd.f32 0.0, %v566
      %v568 = vpop.f32.mrb[0].mxu0
      %v569 = vpop.f32.mrb[0].mxu0
      %v570 = vadd.f32 0.0, %v569
      %v571 = vpop.f32.mrb[0].mxu0
      %572 = vmatprep.mubr.bf16.mxu0 0
      %573 = vmatmul.mubr.bf16.gmra.mrb[0].mxu0 %v525
      %v574 = vpop.f32.mrb[0].mxu0
      %v575 = vadd.f32 0.0, %v574
      %v576 = vpop.f32.mrb[0].mxu0
      %v577 = vpop.f32.mrb[0].mxu0
      %v578 = vadd.f32 0.0, %v577
      %v579 = vpop.f32.mrb[0].mxu0
      %580 = vmatprep.mubr.bf16.mxu0 0
      %581 = vmatmul.mubr.bf16.gmra.mrb[0].mxu0 %v526
      %v582 = vpop.f32.mrb[0].mxu0
      %v583 = vadd.f32 0.0, %v582
      %v584 = vpop.f32.mrb[0].mxu0
      %v585 = vpop.f32.mrb[0].mxu0
      %v586 = vadd.f32 0.0, %v585
      %v587 = vpop.f32.mrb[0].mxu0
      %588 = vmatprep.mubr.bf16.mxu0 0
      %589 = vmatmul.mubr.bf16.gmra.mrb[0].mxu0 %v527
      %v590 = vpop.f32.mrb[0].mxu0
      %v591 = vadd.f32 0.0, %v590
      %v592 = vpop.f32.mrb[0].mxu0
      %v593 = vpop.f32.mrb[0].mxu0
      %v594 = vadd.f32 0.0, %v593
      %v595 = vpop.f32.mrb[0].mxu0
      %596 = vdwg.mxu0
      %v597 = vadd.f32 %v492, %v567
      %v598 = vadd.f32 %v493, %v570
      %v599 = vadd.f32 %v494, %v575
      %v600 = vadd.f32 %v495, %v578
      %v601 = vadd.f32 %v496, %v583
      %v602 = vadd.f32 %v497, %v586
      %v603 = vadd.f32 %v498, %v591
      %v604 = vadd.f32 %v499, %v594
      %605 = vst [vmem:[#allocation2] sm:$0xff] %v597
      %606 = vst [vmem:[#allocation2 + $0x8] sm:$0xff] %v598
      %607 = vst [vmem:[#allocation2 + $0x10] sm:$0xff] %v599
      %608 = vst [vmem:[#allocation2 + $0x18] sm:$0xff] %v600
      %609 = vst [vmem:[#allocation2 + $0x20] sm:$0xff] %v601
      %610 = vst [vmem:[#allocation2 + $0x28] sm:$0xff] %v602
      %611 = vst [vmem:[#allocation2 + $0x30] sm:$0xff] %v603
      %612 = vst [vmem:[#allocation2 + $0x38] sm:$0xff] %v604
      // Predicated region
      $region41: #{gcn_forward.2} parent=35 // pred_check
        %p613 = pneg %p247
      $region42: #{gcn_forward.2} parent=35 // pred_check_branch
        %615 = sbr.rel (%p613) target = $region44
      $region43: #{gcn_forward.2} parent=35 // pred_region
        %v616 = vld [vmem:[#allocation2] sm:$0xff]
        %v617 = vld [vmem:[#allocation2 + $0x8] sm:$0xff]
        %v618 = vld [vmem:[#allocation2 + $0x10] sm:$0xff]
        %v619 = vld [vmem:[#allocation2 + $0x18] sm:$0xff]
        %v620 = vld [vmem:[#allocation2 + $0x20] sm:$0xff]
        %v621 = vld [vmem:[#allocation2 + $0x28] sm:$0xff]
        %v622 = vld [vmem:[#allocation2 + $0x30] sm:$0xff]
        %v623 = vld [vmem:[#allocation2 + $0x38] sm:$0xff]
        %v624 = vld [vmem:[%s3] sm:$0x1]
        %v626 = vlaneseq
        %v627 = vshrl.u32 %v626, 7
        %v628 = vsub.s32 0, %v627
        %v629 = vrot.slane %v624, %v628
        %v631 = vadd.f32 %v616, %v629
        %v632 = vadd.f32 %v617, %v629
        %v633 = vadd.f32 %v618, %v629
        %v634 = vadd.f32 %v619, %v629
        %v635 = vadd.f32 %v620, %v629
        %v636 = vadd.f32 %v621, %v629
        %v637 = vadd.f32 %v622, %v629
        %v638 = vadd.f32 %v623, %v629
        %v639 = vmax.f32 %v631, 0.0
        %v640 = vmax.f32 %v632, 0.0
        %v641 = vmax.f32 %v633, 0.0
        %v642 = vmax.f32 %v634, 0.0
        %v643 = vmax.f32 %v635, 0.0
        %v644 = vmax.f32 %v636, 0.0
        %v645 = vmax.f32 %v637, 0.0
        %v646 = vmax.f32 %v638, 0.0
        %v647 = vpack.c.bf16 %v640, %v639
        %v648 = vpack.c.bf16 %v642, %v641
        %v649 = vpack.c.bf16 %v644, %v643
        %v650 = vpack.c.bf16 %v646, %v645
        %v655 = vunpack.c.l.b16 %v647
        %v656 = vunpack.c.h.b16 %v647
        %v657 = vunpack.c.l.b16 %v648
        %v658 = vunpack.c.h.b16 %v648
        %v659 = vunpack.c.l.b16 %v649
        %v660 = vunpack.c.h.b16 %v649
        %v661 = vunpack.c.l.b16 %v650
        %v662 = vunpack.c.h.b16 %v650
        %v663 = vpack.c.b16 %v655, %v655
        %v664 = vpack.c.b16 %v656, %v656
        %v665 = vpack.c.b16 %v657, %v657
        %v666 = vpack.c.b16 %v658, %v658
        %v667 = vpack.c.b16 %v659, %v659
        %v668 = vpack.c.b16 %v660, %v660
        %v669 = vpack.c.b16 %v661, %v661
        %v670 = vpack.c.b16 %v662, %v662
        %679 = vst [vmem:[%s244] sm:$0xf] %v663
        %680 = vst [vmem:[%s244 + $0x4] sm:$0xf] %v664
        %681 = vst [vmem:[%s244 + $0x8] sm:$0xf] %v665
        %682 = vst [vmem:[%s244 + $0xc] sm:$0xf] %v666
        %683 = vst [vmem:[%s244 + $0x10] sm:$0xf] %v667
        %684 = vst [vmem:[%s244 + $0x14] sm:$0xf] %v668
        %685 = vst [vmem:[%s244 + $0x18] sm:$0xf] %v669
        %686 = vst [vmem:[%s244 + $0x1c] sm:$0xf] %v670
      $region44: #{gcn_forward.2} parent=35 // pred_fallthru
        _
      %s687 = smul.u32 8, %s19
      %p688 = scmp.lt.s32.totalorder %s687, 15
      %s689 = scalar_select %p688, %s687, 15
      %s690 = smul.addr %s689, 4
      %s691 = scalar_lea.vmem %s4, %s690
      // Predicated region
      $region45: #{gcn_forward.2} parent=35 // pred_check
        %p692 = pneg %p141
      $region46: #{gcn_forward.2} parent=35 // pred_check_branch
        %694 = sbr.rel (%p692) target = $region48
      $region47: #{gcn_forward.2} parent=35 // pred_region
        %s695 = smul.u32 8, %s19
      $region48: #{gcn_forward.2} parent=35 // pred_fallthru
        _
    $region36: #{gcn_forward.2} parent=5 // pred_fallthru
      _
    %p696 = scmp.le.s32.totalorder 2, %s10
    // Predicated region
    $region49: #{gcn_forward.2} parent=5 // pred_check
      %p697 = pneg %p696
    $region50: #{gcn_forward.2} parent=5 // pred_check_branch
      %699 = sbr.rel (%p697) target = $region52
    $region51: #{gcn_forward.2} parent=5 // pred_region
      %s700 = ssub.s32 %s10, 2
      // Predicated region
      $region53: #{gcn_forward.2} parent=51 // pred_check
        %p701 = pneg %p147
      $region54: #{gcn_forward.2} parent=51 // pred_check_branch
        %703 = sbr.rel (%p701) target = $region56
      $region55: #{gcn_forward.2} parent=51 // pred_region
        %s704 = smul.u32 8, %s21
        %p705 = scmp.lt.s32.totalorder %s704, 15
        %s706 = scalar_select %p705, %s704, 15
        %s707 = smul.addr %s706, 4
        %s708 = scalar_lea.vmem %s4, %s707
      $region56: #{gcn_forward.2} parent=51 // pred_fallthru
        _
    $region52: #{gcn_forward.2} parent=5 // pred_fallthru
      _
  $region6: #{gcn_forward.2} parent=0 // loop_footer
    %s14 = sadd.s32 1, %s10
  $region7: #{gcn_forward.2} parent=0 // loop_footer_branch
    %9 = sbr.rel target = $region3
  $region8: #{gcn_forward.2} parent=0 // loop_exit
    _

// kernel: gcn_forward.3
$region0: #{gcn_forward.3}
  #allocation0 [shape = 'u32[]', space=smem, size = 0x4, offset = 0x4, fixed_abs, tag = 'smem constant byte address 0x4 - core index']
  #allocation1 [shape = 'u32[144,128]{1,0:T(1,128)}', space=vmem, size = 0x12000, scoped, tag = 'internal scratch']
  #allocation2 [shape = 'f32[64,128]{1,0:T(8,128)}', space=vmem, size = 0x8000, scoped, tag = 'scratch operand']
  %s0 = inlined_call_operand.vmem [shape: bf16[128,128], index: 0, kind: input, shape index: {}]
  %s1 = inlined_call_operand.vmem [shape: bf16[128,128], index: 1, kind: input, shape index: {}]
  %s2 = inlined_call_operand.vmem [shape: bf16[128,128], index: 2, kind: input, shape index: {}]
  %s3 = inlined_call_operand.vmem [shape: f32[1,128], index: 3, kind: input, shape index: {}]
  %s4 = inlined_call_operand.vmem [shape: f32[128,128], index: 4, kind: output, shape index: {}]
  %s5 = sld [smem:[#allocation0]]
  $region57: #{gcn_forward.3} parent=0
    _
  %s7 = ssub.s32 1, %s5
  %s8 = scalar_select 0, %s7, %s5
  loop: start=0, step=1, limit=4
  $region2: #{gcn_forward.3} parent=0 // loop_pre_header
    _
  $region3: #{gcn_forward.3} parent=0 // loop_header
    %s10 = sphi 0, %s14
    %p11 = scmp.ge.s32.totalorder %s10, 4
    %s17 = sphi 0, %s29
    %s18 = sphi 0, %s25
    %s19 = sphi 0, %s17
    %s20 = sphi 0, %s18
    %s21 = sphi 0, %s19
    %s22 = sphi 0, %s20
    %s34 = sphi 0, %s36
    %s37 = sphi 0, %s34
    %s38 = sphi 0, %s37
    %s54 = sphi 0, %s38
    %s60 = sphi 0, %s62
    %s63 = sphi 0, %s60
    %s64 = sphi 0, %s63
    %s80 = sphi 0, %s64
    %s84 = sphi 0, %s84
    %s86 = sphi 0, %s84
    %s87 = sphi 0, %s86
    %s101 = sphi 0, %s87
    %s105 = sphi 0, %s105
    %s107 = sphi 0, %s105
    %s108 = sphi 0, %s107
    %s122 = sphi 0, %s108
    %s128 = sphi 0, %s130
    %s131 = sphi 0, %s128
    %s132 = sphi 0, %s131
    %s148 = sphi 0, %s132
  $region4: #{gcn_forward.3} parent=0 // loop_header_branch
    %13 = sbr.rel (%p11) target = $region8
  $region5: #{gcn_forward.3} parent=0 // loop_body
    %s15 = ssub.s32 %s10, 1
    %s16 = ssub.s32 %s10, 2
    %s23 = sadd.s32 1, %s18
    %p24 = scmp.ge.s32.totalorder %s23, 1
    %s25 = scalar_select %p24, 0, %s23
    %s26 = sadd.s32 1, %s17
    %s27 = scalar_select %p24, %s26, %s17
    %p28 = scmp.ge.s32.totalorder %s27, 2
    %s29 = scalar_select %p28, 0, %s27
    %s30 = ssub.s32 %s17, %s29
    %s31 = ssub.s32 %s18, %s25
    %s32 = sor.u32 %s30, %s31
    %p33 = scmp.eq.s32.totalorder %s32, 0
    %s35 = sadd.s32 %s34, 1
    %s36 = scalar_select %p33, %s34, %s35
    %p39 = pneg %p33
    %p40 = scmp.eq.s32.totalorder %s10, 1
    %p41 = por %p39, %p40
    %p42 = scmp.ne.s32.totalorder %s34, %s37
    %p43 = scmp.eq.s32.totalorder %s10, 0
    %p44 = por %p42, %p43
    %p45 = scmp.ne.s32.totalorder %s34, %s37
    %p46 = scmp.eq.s32.totalorder %s15, 1
    %p47 = por %p45, %p46
    %p48 = scmp.ne.s32.totalorder %s37, %s38
    %p49 = scmp.eq.s32.totalorder %s15, 0
    %p50 = por %p48, %p49
    %p51 = scmp.ne.s32.totalorder %s37, %s38
    %p52 = scmp.eq.s32.totalorder %s16, 1
    %p53 = por %p51, %p52
    %p55 = scmp.ne.s32.totalorder %s38, %s54
    %p56 = scmp.eq.s32.totalorder %s16, 0
    %p57 = por %p55, %p56
    %s58 = ssub.s32 %s18, %s25
    %p59 = scmp.eq.s32.totalorder %s58, 0
    %s61 = sadd.s32 %s60, 1
    %s62 = scalar_select %p59, %s60, %s61
    %p65 = pneg %p59
    %p66 = scmp.eq.s32.totalorder %s10, 1
    %p67 = por %p65, %p66
    %p68 = scmp.ne.s32.totalorder %s60, %s63
    %p69 = scmp.eq.s32.totalorder %s10, 0
    %p70 = por %p68, %p69
    %p71 = scmp.ne.s32.totalorder %s60, %s63
    %p72 = scmp.eq.s32.totalorder %s15, 1
    %p73 = por %p71, %p72
    %p74 = scmp.ne.s32.totalorder %s63, %s64
    %p75 = scmp.eq.s32.totalorder %s15, 0
    %p76 = por %p74, %p75
    %p77 = scmp.ne.s32.totalorder %s63, %s64
    %p78 = scmp.eq.s32.totalorder %s16, 1
    %p79 = por %p77, %p78
    %p81 = scmp.ne.s32.totalorder %s64, %s80
    %p82 = scmp.eq.s32.totalorder %s16, 0
    %p83 = por %p81, %p82
    %s85 = sadd.s32 %s84, 1
    %p88 = scmp.eq.s32.totalorder %s10, 1
    %p89 = scmp.ne.s32.totalorder %s84, %s86
    %p90 = scmp.eq.s32.totalorder %s10, 0
    %p91 = por %p89, %p90
    %p92 = scmp.ne.s32.totalorder %s84, %s86
    %p93 = scmp.eq.s32.totalorder %s15, 1
    %p94 = por %p92, %p93
    %p95 = scmp.ne.s32.totalorder %s86, %s87
    %p96 = scmp.eq.s32.totalorder %s15, 0
    %p97 = por %p95, %p96
    %p98 = scmp.ne.s32.totalorder %s86, %s87
    %p99 = scmp.eq.s32.totalorder %s16, 1
    %p100 = por %p98, %p99
    %p102 = scmp.ne.s32.totalorder %s87, %s101
    %p103 = scmp.eq.s32.totalorder %s16, 0
    %p104 = por %p102, %p103
    %s106 = sadd.s32 %s105, 1
    %p109 = scmp.eq.s32.totalorder %s10, 1
    %p110 = scmp.ne.s32.totalorder %s105, %s107
    %p111 = scmp.eq.s32.totalorder %s10, 0
    %p112 = por %p110, %p111
    %p113 = scmp.ne.s32.totalorder %s105, %s107
    %p114 = scmp.eq.s32.totalorder %s15, 1
    %p115 = por %p113, %p114
    %p116 = scmp.ne.s32.totalorder %s107, %s108
    %p117 = scmp.eq.s32.totalorder %s15, 0
    %p118 = por %p116, %p117
    %p119 = scmp.ne.s32.totalorder %s107, %s108
    %p120 = scmp.eq.s32.totalorder %s16, 1
    %p121 = por %p119, %p120
    %p123 = scmp.ne.s32.totalorder %s108, %s122
    %p124 = scmp.eq.s32.totalorder %s16, 0
    %p125 = por %p123, %p124
    %s126 = ssub.s32 %s17, %s29
    %p127 = scmp.eq.s32.totalorder %s126, 0
    %s129 = sadd.s32 %s128, 1
    %s130 = scalar_select %p127, %s128, %s129
    %p133 = pneg %p127
    %p134 = scmp.eq.s32.totalorder %s10, 1
    %p135 = por %p133, %p134
    %p136 = scmp.ne.s32.totalorder %s128, %s131
    %p137 = scmp.eq.s32.totalorder %s10, 0
    %p138 = por %p136, %p137
    %p139 = scmp.ne.s32.totalorder %s128, %s131
    %p140 = scmp.eq.s32.totalorder %s15, 1
    %p141 = por %p139, %p140
    %p142 = scmp.ne.s32.totalorder %s131, %s132
    %p143 = scmp.eq.s32.totalorder %s15, 0
    %p144 = por %p142, %p143
    %p145 = scmp.ne.s32.totalorder %s131, %s132
    %p146 = scmp.eq.s32.totalorder %s16, 1
    %p147 = por %p145, %p146
    %p149 = scmp.ne.s32.totalorder %s132, %s148
    %p150 = scmp.eq.s32.totalorder %s16, 0
    %p151 = por %p149, %p150
    %p152 = scmp.le.s32.totalorder 1, %s10
    %p153 = scmp.lt.s32.totalorder %s10, 3
    %p154 = pnand %p152, %p153
    %p155 = pneg %p154
    // Predicated region
    $region9: #{gcn_forward.3} parent=5 // pred_check
      _
    $region10: #{gcn_forward.3} parent=5 // pred_check_branch
      %157 = sbr.rel (%p154) target = $region12
    $region11: #{gcn_forward.3} parent=5 // pred_region
      %s158 = ssub.s32 %s10, 1
      // Predicated region
      $region13: #{gcn_forward.3} parent=11 // pred_check
        %p159 = pneg %p76
      $region14: #{gcn_forward.3} parent=11 // pred_check_branch
        %161 = sbr.rel (%p159) target = $region16
      $region15: #{gcn_forward.3} parent=11 // pred_region
        %s162 = smul.u32 16, %s20
        %p163 = scmp.lt.s32.totalorder %s162, 15
        %s164 = scalar_select %p163, %s162, 15
        %s165 = smul.addr %s164, 4
        %s166 = scalar_lea.vmem %s1, %s165
        %s167 = smul.u32 16, %s20
      $region16: #{gcn_forward.3} parent=11 // pred_fallthru
        _
      // Predicated region
      $region17: #{gcn_forward.3} parent=11 // pred_check
        %p168 = pneg %p97
      $region18: #{gcn_forward.3} parent=11 // pred_check_branch
        %170 = sbr.rel (%p168) target = $region20
      $region19: #{gcn_forward.3} parent=11 // pred_region
        _
      $region20: #{gcn_forward.3} parent=11 // pred_fallthru
        _
      // Predicated region
      $region21: #{gcn_forward.3} parent=11 // pred_check
        %p171 = pneg %p118
      $region22: #{gcn_forward.3} parent=11 // pred_check_branch
        %173 = sbr.rel (%p171) target = $region24
      $region23: #{gcn_forward.3} parent=11 // pred_region
        _
      $region24: #{gcn_forward.3} parent=11 // pred_fallthru
        _
    $region12: #{gcn_forward.3} parent=5 // pred_fallthru
      _
    %p174 = scmp.lt.s32.totalorder %s10, 2
    // Predicated region
    $region25: #{gcn_forward.3} parent=5 // pred_check
      %p175 = pneg %p174
    $region26: #{gcn_forward.3} parent=5 // pred_check_branch
      %177 = sbr.rel (%p175) target = $region28
    $region27: #{gcn_forward.3} parent=5 // pred_region
      // Predicated region
      $region29: #{gcn_forward.3} parent=27 // pred_check
        %p178 = pneg %p44
      $region30: #{gcn_forward.3} parent=27 // pred_check_branch
        %180 = sbr.rel (%p178) target = $region32
      $region31: #{gcn_forward.3} parent=27 // pred_region
        %s181 = smul.u32 8, %s17
        %p182 = scmp.lt.s32.totalorder %s181, 15
        %s183 = scalar_select %p182, %s181, 15
        %p184 = scmp.lt.s32.totalorder %s18, 0
        %s185 = scalar_select %p184, %s18, 0
        %s186 = sadd.s32 %s185, %s183
        %s187 = smul.addr %s186, 4
        %s188 = scalar_lea.vmem %s0, %s187
        %s189 = smul.u32 8, %s17
      $region32: #{gcn_forward.3} parent=27 // pred_fallthru
        _
    $region28: #{gcn_forward.3} parent=5 // pred_fallthru
      _
    %p190 = scmp.le.s32.totalorder 1, %s10
    %p191 = scmp.lt.s32.totalorder %s10, 3
    %p192 = pnand %p190, %p191
    %p193 = pneg %p192
    // Predicated region
    $region33: #{gcn_forward.3} parent=5 // pred_check
      _
    $region34: #{gcn_forward.3} parent=5 // pred_check_branch
      %195 = sbr.rel (%p192) target = $region36
    $region35: #{gcn_forward.3} parent=5 // pred_region
      %s196 = ssub.s32 %s10, 1
      %s197 = smul.u32 8, %s19
      %p198 = scmp.lt.s32.totalorder %s197, 15
      %s199 = scalar_select %p198, %s197, 15
      %p200 = scmp.lt.s32.totalorder %s20, 0
      %s201 = scalar_select %p200, %s20, 0
      %s202 = sadd.s32 %s201, %s199
      %s203 = smul.addr %s202, 4
      %s204 = scalar_lea.vmem %s0, %s203
      %p205 = pneg %p50
      %p206 = pneg %p47
      %s207 = smul.u32 16, %s20
      %p208 = scmp.lt.s32.totalorder %s207, 15
      %s209 = scalar_select %p208, %s207, 15
      %s210 = smul.addr %s209, 4
      %s211 = scalar_lea.vmem %s1, %s210
      %p212 = pneg %p76
      %p213 = pneg %p73
      %p214 = pneg %p97
      %p215 = pneg %p94
      %p216 = pneg %p118
      %p217 = pneg %p115
      %p218 = pneg %p144
      %p219 = pneg %p141
      %s220 = smul.u32 8, %s19
      %p221 = scmp.lt.s32.totalorder %s220, 15
      %s222 = scalar_select %p221, %s220, 15
      %s223 = smul.addr %s222, 8
      %s224 = scalar_lea.vmem %s4, %s223
      %s225 = smul.u32 8, %s19
      %p226 = scmp.lt.s32.totalorder %s225, 15
      %s227 = scalar_select %p226, %s225, 15
      %p228 = scmp.lt.s32.totalorder %s20, 0
      %s229 = scalar_select %p228, %s20, 0
      %s230 = sadd.s32 %s229, %s227
      %s231 = smul.addr %s230, 4
      %s232 = scalar_lea.vmem %s0, %s231
      %s233 = smul.u32 8, %s19
      %s234 = smul.u32 16, %s20
      %p235 = scmp.lt.s32.totalorder %s234, 15
      %s236 = scalar_select %p235, %s234, 15
      %s237 = smul.addr %s236, 4
      %s238 = scalar_lea.vmem %s1, %s237
      %s239 = smul.u32 16, %s20
      %s240 = smul.u32 8, %s19
      %p241 = scmp.lt.s32.totalorder %s240, 15
      %s242 = scalar_select %p241, %s240, 15
      %s243 = smul.addr %s242, 8
      %s244 = scalar_lea.vmem %s4, %s243
      %s245 = smul.u32 8, %s19
      %p247 = scmp.eq.s32.totalorder %s20, 0
      // Predicated region
      $region37: #{gcn_forward.3} parent=35 // pred_check
        %p248 = pneg %p247
      $region38: #{gcn_forward.3} parent=35 // pred_check_branch
        %250 = sbr.rel (%p248) target = $region40
      $region39: #{gcn_forward.3} parent=35 // pred_region
        %251 = vst [vmem:[#allocation2] sm:$0xff] 0.0
        %252 = vst [vmem:[#allocation2 + $0x8] sm:$0xff] 0.0
        %253 = vst [vmem:[#allocation2 + $0x10] sm:$0xff] 0.0
        %254 = vst [vmem:[#allocation2 + $0x18] sm:$0xff] 0.0
        %255 = vst [vmem:[#allocation2 + $0x20] sm:$0xff] 0.0
        %256 = vst [vmem:[#allocation2 + $0x28] sm:$0xff] 0.0
        %257 = vst [vmem:[#allocation2 + $0x30] sm:$0xff] 0.0
        %258 = vst [vmem:[#allocation2 + $0x38] sm:$0xff] 0.0
      $region40: #{gcn_forward.3} parent=35 // pred_fallthru
        _
      %v259 = vld [vmem:[%s238] sm:$0xf]
      %v260 = vld [vmem:[%s238 + $0x4] sm:$0xf]
      %v261 = vld [vmem:[%s238 + $0x8] sm:$0xf]
      %v262 = vld [vmem:[%s238 + $0xc] sm:$0xf]
      %v263 = vld [vmem:[%s238 + $0x10] sm:$0xf]
      %v264 = vld [vmem:[%s238 + $0x14] sm:$0xf]
      %v265 = vld [vmem:[%s238 + $0x18] sm:$0xf]
      %v266 = vld [vmem:[%s238 + $0x1c] sm:$0xf]
      %v267 = vld [vmem:[%s238 + $0x20] sm:$0xf]
      %v268 = vld [vmem:[%s238 + $0x24] sm:$0xf]
      %v269 = vld [vmem:[%s238 + $0x28] sm:$0xf]
      %v270 = vld [vmem:[%s238 + $0x2c] sm:$0xf]
      %v271 = vld [vmem:[%s238 + $0x30] sm:$0xf]
      %v272 = vld [vmem:[%s238 + $0x34] sm:$0xf]
      %v273 = vld [vmem:[%s238 + $0x38] sm:$0xf]
      %v274 = vld [vmem:[%s238 + $0x3c] sm:$0xf]
      %v275 = vld [vmem:[%s2] sm:$0xf]
      %v276 = vld [vmem:[%s2 + $0x4] sm:$0xf]
      %v277 = vld [vmem:[%s2 + $0x8] sm:$0xf]
      %v278 = vld [vmem:[%s2 + $0xc] sm:$0xf]
      %v279 = vld [vmem:[%s2 + $0x10] sm:$0xf]
      %v280 = vld [vmem:[%s2 + $0x14] sm:$0xf]
      %v281 = vld [vmem:[%s2 + $0x18] sm:$0xf]
      %v282 = vld [vmem:[%s2 + $0x1c] sm:$0xf]
      %v283 = vld [vmem:[%s2 + $0x20] sm:$0xf]
      %v284 = vld [vmem:[%s2 + $0x24] sm:$0xf]
      %v285 = vld [vmem:[%s2 + $0x28] sm:$0xf]
      %v286 = vld [vmem:[%s2 + $0x2c] sm:$0xf]
      %v287 = vld [vmem:[%s2 + $0x30] sm:$0xf]
      %v288 = vld [vmem:[%s2 + $0x34] sm:$0xf]
      %v289 = vld [vmem:[%s2 + $0x38] sm:$0xf]
      %v290 = vld [vmem:[%s2 + $0x3c] sm:$0xf]
      %v307 = vunpack.c.l.b16 %v259
      %v308 = vunpack.c.l.b16 %v260
      %v309 = vunpack.c.l.b16 %v261
      %v310 = vunpack.c.l.b16 %v262
      %v311 = vunpack.c.l.b16 %v263
      %v312 = vunpack.c.l.b16 %v264
      %v313 = vunpack.c.l.b16 %v265
      %v314 = vunpack.c.l.b16 %v266
      %v315 = vunpack.c.l.b16 %v267
      %v316 = vunpack.c.l.b16 %v268
      %v317 = vunpack.c.l.b16 %v269
      %v318 = vunpack.c.l.b16 %v270
      %v319 = vunpack.c.l.b16 %v271
      %v320 = vunpack.c.l.b16 %v272
      %v321 = vunpack.c.l.b16 %v273
      %v322 = vunpack.c.l.b16 %v274
      %v323 = vpack.c.b16 %v308, %v307
      %v324 = vpack.c.b16 %v310, %v309
      %v325 = vpack.c.b16 %v312, %v311
      %v326 = vpack.c.b16 %v314, %v313
      %v327 = vpack.c.b16 %v316, %v315
      %v328 = vpack.c.b16 %v318, %v317
      %v329 = vpack.c.b16 %v320, %v319
      %v330 = vpack.c.b16 %v322, %v321
      %v355 = vunpack.c.l.b16 %v275
      %v356 = vunpack.c.l.b16 %v276
      %v357 = vunpack.c.l.b16 %v277
      %v358 = vunpack.c.l.b16 %v278
      %v359 = vunpack.c.l.b16 %v279
      %v360 = vunpack.c.l.b16 %v280
      %v361 = vunpack.c.l.b16 %v281
      %v362 = vunpack.c.l.b16 %v282
      %v363 = vunpack.c.l.b16 %v283
      %v364 = vunpack.c.l.b16 %v284
      %v365 = vunpack.c.l.b16 %v285
      %v366 = vunpack.c.l.b16 %v286
      %v367 = vunpack.c.l.b16 %v287
      %v368 = vunpack.c.l.b16 %v288
      %v369 = vunpack.c.l.b16 %v289
      %v370 = vunpack.c.l.b16 %v290
      %v371 = vpack.c.b16 %v356, %v355
      %v372 = vpack.c.b16 %v358, %v357
      %v373 = vpack.c.b16 %v360, %v359
      %v374 = vpack.c.b16 %v362, %v361
      %v375 = vpack.c.b16 %v364, %v363
      %v376 = vpack.c.b16 %v366, %v365
      %v377 = vpack.c.b16 %v368, %v367
      %v378 = vpack.c.b16 %v370, %v369
      %387 = vmatprep.subr.bf16.mxu0 0
      %388 = vmatpush1.bf16.msra.mxu0 %v371
      %389 = vmatprep.subr.bf16.mxu0 0
      %390 = vmatpush1.bf16.msra.mxu0 %v372
      %391 = vmatprep.subr.bf16.mxu0 0
      %392 = vmatpush1.bf16.msra.mxu0 %v373
      %393 = vmatprep.subr.bf16.mxu0 0
      %394 = vmatpush1.bf16.msra.mxu0 %v374
      %395 = vmatprep.subr.bf16.mxu0 0
      %396 = vmatpush1.bf16.msra.mxu0 %v375
      %397 = vmatprep.subr.bf16.mxu0 0
      %398 = vmatpush1.bf16.msra.mxu0 %v376
      %399 = vmatprep.subr.bf16.mxu0 0
      %400 = vmatpush1.bf16.msra.mxu0 %v377
      %401 = vmatprep.subr.bf16.mxu0 0
      %402 = vmatpush1.bf16.msra.mxu0 %v378
      %403 = vmatprep.subr.bf16.mxu0 0
      %404 = vmatpush1.bf16.msra.mxu0 0
      %405 = vmatprep.subr.bf16.mxu0 0
      %406 = vmatpush1.bf16.msra.mxu0 0
      %407 = vmatprep.subr.bf16.mxu0 0
      %408 = vmatpush1.bf16.msra.mxu0 0
      %409 = vmatprep.subr.bf16.mxu0 0
      %410 = vmatpush1.bf16.msra.mxu0 0
      %411 = vmatprep.subr.bf16.mxu0 0
      %412 = vmatpush1.bf16.msra.mxu0 0
      %413 = vmatprep.subr.bf16.mxu0 0
      %414 = vmatpush1.bf16.msra.mxu0 0
      %415 = vmatprep.subr.bf16.mxu0 0
      %416 = vmatpush1.bf16.msra.mxu0 0
      %417 = vmatprep.subr.bf16.mxu0 0
      %418 = vmatpush1.bf16.msra.mxu0 0
      %419 = vmatprep.mubr.bf16.mxu0 0
      %420 = vmatmul.mubr.bf16.gmra.mrb[0].mxu0 %v323
      %v421 = vpop.f32.mrb[0].mxu0
      %v422 = vadd.f32 0.0, %v421
      %v423 = vpop.f32.mrb[0].mxu0
      %v424 = vpop.f32.mrb[0].mxu0
      %v425 = vadd.f32 0.0, %v424
      %v426 = vpop.f32.mrb[0].mxu0
      %427 = vmatprep.mubr.bf16.mxu0 0
      %428 = vmatmul.mubr.bf16.gmra.mrb[0].mxu0 %v324
      %v429 = vpop.f32.mrb[0].mxu0
      %v430 = vadd.f32 0.0, %v429
      %v431 = vpop.f32.mrb[0].mxu0
      %v432 = vpop.f32.mrb[0].mxu0
      %v433 = vadd.f32 0.0, %v432
      %v434 = vpop.f32.mrb[0].mxu0
      %435 = vmatprep.mubr.bf16.mxu0 0
      %436 = vmatmul.mubr.bf16.gmra.mrb[0].mxu0 %v325
      %v437 = vpop.f32.mrb[0].mxu0
      %v438 = vadd.f32 0.0, %v437
      %v439 = vpop.f32.mrb[0].mxu0
      %v440 = vpop.f32.mrb[0].mxu0
      %v441 = vadd.f32 0.0, %v440
      %v442 = vpop.f32.mrb[0].mxu0
      %443 = vmatprep.mubr.bf16.mxu0 0
      %444 = vmatmul.mubr.bf16.gmra.mrb[0].mxu0 %v326
      %v445 = vpop.f32.mrb[0].mxu0
      %v446 = vadd.f32 0.0, %v445
      %v447 = vpop.f32.mrb[0].mxu0
      %v448 = vpop.f32.mrb[0].mxu0
      %v449 = vadd.f32 0.0, %v448
      %v450 = vpop.f32.mrb[0].mxu0
      %451 = vmatprep.mubr.bf16.mxu0 0
      %452 = vmatmul.mubr.bf16.gmra.mrb[0].mxu0 %v327
      %v453 = vpop.f32.mrb[0].mxu0
      %v454 = vadd.f32 0.0, %v453
      %v455 = vpop.f32.mrb[0].mxu0
      %v456 = vpop.f32.mrb[0].mxu0
      %v457 = vadd.f32 0.0, %v456
      %v458 = vpop.f32.mrb[0].mxu0
      %459 = vmatprep.mubr.bf16.mxu0 0
      %460 = vmatmul.mubr.bf16.gmra.mrb[0].mxu0 %v328
      %v461 = vpop.f32.mrb[0].mxu0
      %v462 = vadd.f32 0.0, %v461
      %v463 = vpop.f32.mrb[0].mxu0
      %v464 = vpop.f32.mrb[0].mxu0
      %v465 = vadd.f32 0.0, %v464
      %v466 = vpop.f32.mrb[0].mxu0
      %467 = vmatprep.mubr.bf16.mxu0 0
      %468 = vmatmul.mubr.bf16.gmra.mrb[0].mxu0 %v329
      %v469 = vpop.f32.mrb[0].mxu0
      %v470 = vadd.f32 0.0, %v469
      %v471 = vpop.f32.mrb[0].mxu0
      %v472 = vpop.f32.mrb[0].mxu0
      %v473 = vadd.f32 0.0, %v472
      %v474 = vpop.f32.mrb[0].mxu0
      %475 = vmatprep.mubr.bf16.mxu0 0
      %476 = vmatmul.mubr.bf16.gmra.mrb[0].mxu0 %v330
      %v477 = vpop.f32.mrb[0].mxu0
      %v478 = vadd.f32 0.0, %v477
      %v479 = vpop.f32.mrb[0].mxu0
      %v480 = vpop.f32.mrb[0].mxu0
      %v481 = vadd.f32 0.0, %v480
      %v482 = vpop.f32.mrb[0].mxu0
      %483 = vdwg.mxu0
      %v484 = vpack.c.bf16 %v425, %v422
      %v485 = vpack.c.bf16 %v433, %v430
      %v486 = vpack.c.bf16 %v441, %v438
      %v487 = vpack.c.bf16 %v449, %v446
      %v488 = vpack.c.bf16 %v457, %v454
      %v489 = vpack.c.bf16 %v465, %v462
      %v490 = vpack.c.bf16 %v473, %v470
      %v491 = vpack.c.bf16 %v481, %v478
      %v492 = vld [vmem:[#allocation2] sm:$0xff]
      %v493 = vld [vmem:[#allocation2 + $0x8] sm:$0xff]
      %v494 = vld [vmem:[#allocation2 + $0x10] sm:$0xff]
      %v495 = vld [vmem:[#allocation2 + $0x18] sm:$0xff]
      %v496 = vld [vmem:[#allocation2 + $0x20] sm:$0xff]
      %v497 = vld [vmem:[#allocation2 + $0x28] sm:$0xff]
      %v498 = vld [vmem:[#allocation2 + $0x30] sm:$0xff]
      %v499 = vld [vmem:[#allocation2 + $0x38] sm:$0xff]
      %v500 = vld [vmem:[%s232] sm:$0xf]
      %v501 = vld [vmem:[%s232 + $0x4] sm:$0xf]
      %v502 = vld [vmem:[%s232 + $0x8] sm:$0xf]
      %v503 = vld [vmem:[%s232 + $0xc] sm:$0xf]
      %v504 = vld [vmem:[%s232 + $0x10] sm:$0xf]
      %v505 = vld [vmem:[%s232 + $0x14] sm:$0xf]
      %v506 = vld [vmem:[%s232 + $0x18] sm:$0xf]
      %v507 = vld [vmem:[%s232 + $0x1c] sm:$0xf]
      %v516 = vunpack.c.l.b16 %v500
      %v517 = vunpack.c.l.b16 %v501
      %v518 = vunpack.c.l.b16 %v502
      %v519 = vunpack.c.l.b16 %v503
      %v520 = vunpack.c.l.b16 %v504
      %v521 = vunpack.c.l.b16 %v505
      %v522 = vunpack.c.l.b16 %v506
      %v523 = vunpack.c.l.b16 %v507
      %v524 = vpack.c.b16 %v517, %v516
      %v525 = vpack.c.b16 %v519, %v518
      %v526 = vpack.c.b16 %v521, %v520
      %v527 = vpack.c.b16 %v523, %v522
      %532 = vmatprep.subr.bf16.mxu0 0
      %533 = vmatpush1.bf16.msra.mxu0 %v484
      %534 = vmatprep.subr.bf16.mxu0 0
      %535 = vmatpush1.bf16.msra.mxu0 %v485
      %536 = vmatprep.subr.bf16.mxu0 0
      %537 = vmatpush1.bf16.msra.mxu0 %v486
      %538 = vmatprep.subr.bf16.mxu0 0
      %539 = vmatpush1.bf16.msra.mxu0 %v487
      %540 = vmatprep.subr.bf16.mxu0 0
      %541 = vmatpush1.bf16.msra.mxu0 %v488
      %542 = vmatprep.subr.bf16.mxu0 0
      %543 = vmatpush1.bf16.msra.mxu0 %v489
      %544 = vmatprep.subr.bf16.mxu0 0
      %545 = vmatpush1.bf16.msra.mxu0 %v490
      %546 = vmatprep.subr.bf16.mxu0 0
      %547 = vmatpush1.bf16.msra.mxu0 %v491
      %548 = vmatprep.subr.bf16.mxu0 0
      %549 = vmatpush1.bf16.msra.mxu0 0
      %550 = vmatprep.subr.bf16.mxu0 0
      %551 = vmatpush1.bf16.msra.mxu0 0
      %552 = vmatprep.subr.bf16.mxu0 0
      %553 = vmatpush1.bf16.msra.mxu0 0
      %554 = vmatprep.subr.bf16.mxu0 0
      %555 = vmatpush1.bf16.msra.mxu0 0
      %556 = vmatprep.subr.bf16.mxu0 0
      %557 = vmatpush1.bf16.msra.mxu0 0
      %558 = vmatprep.subr.bf16.mxu0 0
      %559 = vmatpush1.bf16.msra.mxu0 0
      %560 = vmatprep.subr.bf16.mxu0 0
      %561 = vmatpush1.bf16.msra.mxu0 0
      %562 = vmatprep.subr.bf16.mxu0 0
      %563 = vmatpush1.bf16.msra.mxu0 0
      %564 = vmatprep.mubr.bf16.mxu0 0
      %565 = vmatmul.mubr.bf16.gmra.mrb[0].mxu0 %v524
      %v566 = vpop.f32.mrb[0].mxu0
      %v567 = vadd.f32 0.0, %v566
      %v568 = vpop.f32.mrb[0].mxu0
      %v569 = vpop.f32.mrb[0].mxu0
      %v570 = vadd.f32 0.0, %v569
      %v571 = vpop.f32.mrb[0].mxu0
      %572 = vmatprep.mubr.bf16.mxu0 0
      %573 = vmatmul.mubr.bf16.gmra.mrb[0].mxu0 %v525
      %v574 = vpop.f32.mrb[0].mxu0
      %v575 = vadd.f32 0.0, %v574
      %v576 = vpop.f32.mrb[0].mxu0
      %v577 = vpop.f32.mrb[0].mxu0
      %v578 = vadd.f32 0.0, %v577
      %v579 = vpop.f32.mrb[0].mxu0
      %580 = vmatprep.mubr.bf16.mxu0 0
      %581 = vmatmul.mubr.bf16.gmra.mrb[0].mxu0 %v526
      %v582 = vpop.f32.mrb[0].mxu0
      %v583 = vadd.f32 0.0, %v582
      %v584 = vpop.f32.mrb[0].mxu0
      %v585 = vpop.f32.mrb[0].mxu0
      %v586 = vadd.f32 0.0, %v585
      %v587 = vpop.f32.mrb[0].mxu0
      %588 = vmatprep.mubr.bf16.mxu0 0
      %589 = vmatmul.mubr.bf16.gmra.mrb[0].mxu0 %v527
      %v590 = vpop.f32.mrb[0].mxu0
      %v591 = vadd.f32 0.0, %v590
      %v592 = vpop.f32.mrb[0].mxu0
      %v593 = vpop.f32.mrb[0].mxu0
      %v594 = vadd.f32 0.0, %v593
      %v595 = vpop.f32.mrb[0].mxu0
      %596 = vdwg.mxu0
      %v597 = vadd.f32 %v492, %v567
      %v598 = vadd.f32 %v493, %v570
      %v599 = vadd.f32 %v494, %v575
      %v600 = vadd.f32 %v495, %v578
      %v601 = vadd.f32 %v496, %v583
      %v602 = vadd.f32 %v497, %v586
      %v603 = vadd.f32 %v498, %v591
      %v604 = vadd.f32 %v499, %v594
      %605 = vst [vmem:[#allocation2] sm:$0xff] %v597
      %606 = vst [vmem:[#allocation2 + $0x8] sm:$0xff] %v598
      %607 = vst [vmem:[#allocation2 + $0x10] sm:$0xff] %v599
      %608 = vst [vmem:[#allocation2 + $0x18] sm:$0xff] %v600
      %609 = vst [vmem:[#allocation2 + $0x20] sm:$0xff] %v601
      %610 = vst [vmem:[#allocation2 + $0x28] sm:$0xff] %v602
      %611 = vst [vmem:[#allocation2 + $0x30] sm:$0xff] %v603
      %612 = vst [vmem:[#allocation2 + $0x38] sm:$0xff] %v604
      // Predicated region
      $region41: #{gcn_forward.3} parent=35 // pred_check
        %p613 = pneg %p247
      $region42: #{gcn_forward.3} parent=35 // pred_check_branch
        %615 = sbr.rel (%p613) target = $region44
      $region43: #{gcn_forward.3} parent=35 // pred_region
        %v616 = vld [vmem:[#allocation2] sm:$0xff]
        %v617 = vld [vmem:[#allocation2 + $0x8] sm:$0xff]
        %v618 = vld [vmem:[#allocation2 + $0x10] sm:$0xff]
        %v619 = vld [vmem:[#allocation2 + $0x18] sm:$0xff]
        %v620 = vld [vmem:[#allocation2 + $0x20] sm:$0xff]
        %v621 = vld [vmem:[#allocation2 + $0x28] sm:$0xff]
        %v622 = vld [vmem:[#allocation2 + $0x30] sm:$0xff]
        %v623 = vld [vmem:[#allocation2 + $0x38] sm:$0xff]
        %v624 = vld [vmem:[%s3] sm:$0x1]
        %v626 = vlaneseq
        %v627 = vshrl.u32 %v626, 7
        %v628 = vsub.s32 0, %v627
        %v629 = vrot.slane %v624, %v628
        %v631 = vadd.f32 %v616, %v629
        %v632 = vadd.f32 %v617, %v629
        %v633 = vadd.f32 %v618, %v629
        %v634 = vadd.f32 %v619, %v629
        %v635 = vadd.f32 %v620, %v629
        %v636 = vadd.f32 %v621, %v629
        %v637 = vadd.f32 %v622, %v629
        %v638 = vadd.f32 %v623, %v629
        %639 = vst [vmem:[%s244] sm:$0xff] %v631
        %640 = vst [vmem:[%s244 + $0x8] sm:$0xff] %v632
        %641 = vst [vmem:[%s244 + $0x10] sm:$0xff] %v633
        %642 = vst [vmem:[%s244 + $0x18] sm:$0xff] %v634
        %643 = vst [vmem:[%s244 + $0x20] sm:$0xff] %v635
        %644 = vst [vmem:[%s244 + $0x28] sm:$0xff] %v636
        %645 = vst [vmem:[%s244 + $0x30] sm:$0xff] %v637
        %646 = vst [vmem:[%s244 + $0x38] sm:$0xff] %v638
      $region44: #{gcn_forward.3} parent=35 // pred_fallthru
        _
      %s647 = smul.u32 8, %s19
      %p648 = scmp.lt.s32.totalorder %s647, 15
      %s649 = scalar_select %p648, %s647, 15
      %s650 = smul.addr %s649, 8
      %s651 = scalar_lea.vmem %s4, %s650
      // Predicated region
      $region45: #{gcn_forward.3} parent=35 // pred_check
        %p652 = pneg %p141
      $region46: #{gcn_forward.3} parent=35 // pred_check_branch
        %654 = sbr.rel (%p652) target = $region48
      $region47: #{gcn_forward.3} parent=35 // pred_region
        %s655 = smul.u32 8, %s19
      $region48: #{gcn_forward.3} parent=35 // pred_fallthru
        _
    $region36: #{gcn_forward.3} parent=5 // pred_fallthru
      _
    %p656 = scmp.le.s32.totalorder 2, %s10
    // Predicated region
    $region49: #{gcn_forward.3} parent=5 // pred_check
      %p657 = pneg %p656
    $region50: #{gcn_forward.3} parent=5 // pred_check_branch
      %659 = sbr.rel (%p657) target = $region52
    $region51: #{gcn_forward.3} parent=5 // pred_region
      %s660 = ssub.s32 %s10, 2
      // Predicated region
      $region53: #{gcn_forward.3} parent=51 // pred_check
        %p661 = pneg %p147
      $region54: #{gcn_forward.3} parent=51 // pred_check_branch
        %663 = sbr.rel (%p661) target = $region56
      $region55: #{gcn_forward.3} parent=51 // pred_region
        %s664 = smul.u32 8, %s21
        %p665 = scmp.lt.s32.totalorder %s664, 15
        %s666 = scalar_select %p665, %s664, 15
        %s667 = smul.addr %s666, 8
        %s668 = scalar_lea.vmem %s4, %s667
      $region56: #{gcn_forward.3} parent=51 // pred_fallthru
        _
    $region52: #{gcn_forward.3} parent=5 // pred_fallthru
      _
  $region6: #{gcn_forward.3} parent=0 // loop_footer
    %s14 = sadd.s32 1, %s10
  $region7: #{gcn_forward.3} parent=0 // loop_footer_branch
    %9 = sbr.rel target = $region3
  $region8: #{gcn_forward.3} parent=0 // loop_exit
    _

</llo_original>
